<compile_context>
chip_gen: v7x
topology: tpu7x:2x2x1
jax: 0.10.0
libtpu: 0.0.40
codegen_flags: <defaults>
</compile_context>

<pallas_src>
import jax
import jax.numpy as jnp
from jax.experimental import pallas as pl
from jax.experimental.pallas import tpu as pltpu

LATENT_DIM = 10
NUM_CLASSES = 10
TIME_EMB_DIM = 32
TIMESTEPS = 300          # Config.TIMESTEPS
SLAB_K = 128             # padded contraction width of the fused layer-1 matmul

# slab lane layout: [t_emb : 0..31 | x : 32..41 | one_hot(y) : 42..51 | zeros]
_T_OFF = 0
_X_OFF = TIME_EMB_DIM
_Y_OFF = TIME_EMB_DIM + LATENT_DIM


def _round_up(n, m):
    return ((n + m - 1) // m) * m


def _ldm_mlp_kernel(x_ref, tn_ref, y_ref,
                    wt1_ref, bt1_ref, wt2_ref, bt2_ref,
                    w1p_ref, b1_ref, w2_ref, b2_ref,
                    w3_ref, b3_ref, w4_ref, b4_ref,
                    out_ref, slab_ref):
    f32 = jnp.float32
    bm = x_ref.shape[0]
    d_x = x_ref.shape[1]

    # --- time_mlp layer 1 on the VPU: rank-1 outer product, no MXU push ---
    h = jnp.maximum(tn_ref[...] * wt1_ref[...] + bt1_ref[...], 0.0)
    # --- time_mlp layer 2 (32x32) on the MXU ---
    t_emb = jnp.dot(h, wt2_ref[...], preferred_element_type=f32) + bt2_ref[...]

    # --- build the 128-lane activation slab in VMEM scratch ---
    # One full-width store places the label one-hot at lane (_Y_OFF + y) and
    # zeros every other lane (so the scratch needs no separate zero-init and
    # is fully rewritten each grid step, which keeps "parallel" safe).
    # NOTE: like jax.nn.one_hot, out-of-range labels silently contribute 0
    # (PyTorch nn.Embedding would raise); labels are assumed valid.
    lane = jax.lax.broadcasted_iota(jnp.int32, (bm, SLAB_K), 1)
    slab_ref[...] = (lane == (y_ref[...] + _Y_OFF)).astype(f32)
    slab_ref[:, _T_OFF:_T_OFF + TIME_EMB_DIM] = t_emb
    slab_ref[:, _X_OFF:_X_OFF + d_x] = x_ref[...]

    # --- model: single fused layer-1 matmul, then layers 2..4 ---
    h1 = jnp.maximum(
        jnp.dot(slab_ref[...], w1p_ref[...], preferred_element_type=f32)
        + b1_ref[...], 0.0)
    h2 = jnp.maximum(
        jnp.dot(h1, w2_ref[...], preferred_element_type=f32) + b2_ref[...], 0.0)
    h3 = jnp.maximum(
        jnp.dot(h2, w3_ref[...], preferred_element_type=f32) + b3_ref[...], 0.0)
    out_ref[...] = jnp.dot(h3, w4_ref[...], preferred_element_type=f32) + b4_ref[...]


def init_params(key, latent_dim=LATENT_DIM, num_classes=NUM_CLASSES,
                time_emb_dim=TIME_EMB_DIM):
    """Deterministic synthetic parameters (weights stored as (in, out))."""
    ks = jax.random.split(key, 13)
    d_in = latent_dim + 2 * time_emb_dim

    def w(k, shape, fan_in):
        return (jax.random.normal(k, shape, jnp.float32) /
                jnp.sqrt(fan_in)).astype(jnp.float32)

    def b(k, shape):
        return (0.1 * jax.random.normal(k, shape, jnp.float32)).astype(jnp.float32)

    return {
        "emb": w(ks[0], (num_classes, time_emb_dim), 1.0),   # nn.Embedding table
        "wt1": w(ks[1], (1, time_emb_dim), 1.0),
        "bt1": b(ks[2], (1, time_emb_dim)),
        "wt2": w(ks[3], (time_emb_dim, time_emb_dim), time_emb_dim),
        "bt2": b(ks[4], (1, time_emb_dim)),
        "w1":  w(ks[5], (d_in, 256), d_in),
        "b1":  b(ks[6], (1, 256)),
        "w2":  w(ks[7], (256, 512), 256),
        "b2":  b(ks[8], (1, 512)),
        "w3":  w(ks[9], (512, 256), 512),
        "b3":  b(ks[10], (1, 256)),
        "w4":  w(ks[11], (256, latent_dim), 256),
        "b4":  b(ks[12], (1, latent_dim)),
    }


def latent_diffusion_mlp_forward(params, x, t, y, *, block_m=None):
    """x: (B, latent_dim) f32, t: (B,) int32, y: (B,) int32 -> (B, latent_dim) f32.

    block_m: batch tile. v5e -> 128, v6e -> 256+, v7x -> re-derive against its
    64 MiB VMEM (weights ~1.2 MB, so anything <= 2048 is comfortable).
    """
    B, latent_dim = x.shape
    f32 = jnp.float32

    if block_m is None:
        block_m = 256 if B >= 256 else _round_up(B, 8)
    block_m = max(8, _round_up(block_m, 8))
    Bp = _round_up(B, block_m)

    # host glue: normalize time, 2-D int labels, pad the batch to the tile.
    t_norm = (t.astype(f32) / TIMESTEPS).reshape(B, 1)
    y2d = y.astype(jnp.int32).reshape(B, 1)
    if Bp != B:
        pad = Bp - B
        x = jnp.pad(x, ((0, pad), (0, 0)))
        t_norm = jnp.pad(t_norm, ((0, pad), (0, 0)))
        y2d = jnp.pad(y2d, ((0, pad), (0, 0)))

    # Fold the embedding table into W1's label slice and zero-pad W1 to
    # (SLAB_K, 256), reordered to match the slab layout [t_emb | x | one_hot].
    w1 = params["w1"]
    w1x = w1[:latent_dim]
    w1t = w1[latent_dim:latent_dim + TIME_EMB_DIM]
    w1y = w1[latent_dim + TIME_EMB_DIM:]
    w1y_folded = jnp.dot(params["emb"], w1y, preferred_element_type=f32)  # (10,256)
    w1p = jnp.zeros((SLAB_K, w1.shape[1]), f32)
    w1p = w1p.at[_T_OFF:_T_OFF + TIME_EMB_DIM].set(w1t)
    w1p = w1p.at[_X_OFF:_X_OFF + latent_dim].set(w1x)
    w1p = w1p.at[_Y_OFF:_Y_OFF + NUM_CLASSES].set(w1y_folded)

    VMEM = pltpu.MemorySpace.VMEM

    def act_spec(d):                       # batch-tiled activations
        return pl.BlockSpec((block_m, d), lambda i: (i, 0), memory_space=VMEM)

    def const_spec(shape):                 # weights resident across grid steps
        return pl.BlockSpec(shape, lambda i: (0, 0), memory_space=VMEM)

    weights = (params["wt1"], params["bt1"], params["wt2"], params["bt2"],
               w1p, params["b1"], params["w2"], params["b2"],
               params["w3"], params["b3"], params["w4"], params["b4"])

    in_specs = [act_spec(latent_dim), act_spec(1), act_spec(1)]
    in_specs += [const_spec(w.shape) for w in weights]

    out = pl.pallas_call(
        _ldm_mlp_kernel,
        out_shape=jax.ShapeDtypeStruct((Bp, latent_dim), f32),
        grid=(Bp // block_m,),
        in_specs=in_specs,
        out_specs=act_spec(latent_dim),
        scratch_shapes=[pltpu.VMEM((block_m, SLAB_K), f32)],
        compiler_params=pltpu.CompilerParams(
            dimension_semantics=("parallel",)),
    )(x, t_norm, y2d, *weights)
    return out[:B]


def reference_forward(params, x, t, y):
    """Pure-JAX reference matching the PyTorch forward semantics."""
    t_norm = (t.astype(jnp.float32) / TIMESTEPS).reshape(-1, 1)
    h = jnp.maximum(t_norm @ params["wt1"] + params["bt1"], 0.0)
    t_emb = h @ params["wt2"] + params["bt2"]
    y_emb = params["emb"][y]
    xc = jnp.concatenate([x, t_emb, y_emb], axis=-1)
    h1 = jnp.maximum(xc @ params["w1"] + params["b1"], 0.0)
    h2 = jnp.maximum(h1 @ params["w2"] + params["b2"], 0.0)
    h3 = jnp.maximum(h2 @ params["w3"] + params["b3"], 0.0)
    return h3 @ params["w4"] + params["b4"]


if __name__ == "__main__":
    key = jax.random.PRNGKey(0)
    kp, kx, kt, ky = jax.random.split(key, 4)

    B = 32
    params = init_params(kp)
    x = jax.random.normal(kx, (B, LATENT_DIM), jnp.float32)
    t = jax.random.randint(kt, (B,), 0, TIMESTEPS, jnp.int32)
    y = jax.random.randint(ky, (B,), 0, NUM_CLASSES, jnp.int32)

    # block_m=8 forces a 4-step batch grid even at this tiny demo size, so the
    # grid / resident-weight index_maps are actually exercised.
    out = latent_diffusion_mlp_forward(params, x, t, y, block_m=8)
    out = jax.block_until_ready(out)

    ref = reference_forward(params, x, t, y)
    assert out.shape == (B, LATENT_DIM)
    assert jnp.allclose(out, ref, atol=1e-4, rtol=1e-4), "mismatch vs JAX reference"

    print("KERNEL_OK")
</pallas_src>

<mosaic_0001>
module attributes {stable_mosaic.version = 11 : i64} {
  func.func @_ldm_mlp_kernel(%arg0: i32, %arg1: memref<8x10xf32, #tpu.memory_space<vmem>>, %arg2: memref<8x1xf32, #tpu.memory_space<vmem>>, %arg3: memref<8x1xi32, #tpu.memory_space<vmem>>, %arg4: memref<1x32xf32, #tpu.memory_space<vmem>>, %arg5: memref<1x32xf32, #tpu.memory_space<vmem>>, %arg6: memref<32x32xf32, #tpu.memory_space<vmem>>, %arg7: memref<1x32xf32, #tpu.memory_space<vmem>>, %arg8: memref<128x256xf32, #tpu.memory_space<vmem>>, %arg9: memref<1x256xf32, #tpu.memory_space<vmem>>, %arg10: memref<256x512xf32, #tpu.memory_space<vmem>>, %arg11: memref<1x512xf32, #tpu.memory_space<vmem>>, %arg12: memref<512x256xf32, #tpu.memory_space<vmem>>, %arg13: memref<1x256xf32, #tpu.memory_space<vmem>>, %arg14: memref<256x10xf32, #tpu.memory_space<vmem>>, %arg15: memref<1x10xf32, #tpu.memory_space<vmem>>, %arg16: memref<8x10xf32, #tpu.memory_space<vmem>>, %arg17: memref<8x128xf32, #tpu.memory_space<vmem>>) attributes {dimension_semantics = [#tpu.dimension_semantics<parallel>], iteration_bounds = array<i64: 4>, scalar_prefetch = 0 : i64, scratch_operands = 1 : i64, tpu.core_type = #tpu.core_type<tc>, window_params = [{transform_indices = @transform_0, window_bounds = array<i64: 8, 10>}, {transform_indices = @transform_1, window_bounds = array<i64: 8, 1>}, {transform_indices = @transform_2, window_bounds = array<i64: 8, 1>}, {pipeline_mode = #tpu.pipeline_mode<synchronous>, transform_indices = @transform_3, window_bounds = array<i64: 1, 32>}, {pipeline_mode = #tpu.pipeline_mode<synchronous>, transform_indices = @transform_4, window_bounds = array<i64: 1, 32>}, {pipeline_mode = #tpu.pipeline_mode<synchronous>, transform_indices = @transform_5, window_bounds = array<i64: 32, 32>}, {pipeline_mode = #tpu.pipeline_mode<synchronous>, transform_indices = @transform_6, window_bounds = array<i64: 1, 32>}, {pipeline_mode = #tpu.pipeline_mode<synchronous>, transform_indices = @transform_7, window_bounds = array<i64: 128, 256>}, {pipeline_mode = #tpu.pipeline_mode<synchronous>, transform_indices = @transform_8, window_bounds = array<i64: 1, 256>}, {pipeline_mode = #tpu.pipeline_mode<synchronous>, transform_indices = @transform_9, window_bounds = array<i64: 256, 512>}, {pipeline_mode = #tpu.pipeline_mode<synchronous>, transform_indices = @transform_10, window_bounds = array<i64: 1, 512>}, {pipeline_mode = #tpu.pipeline_mode<synchronous>, transform_indices = @transform_11, window_bounds = array<i64: 512, 256>}, {pipeline_mode = #tpu.pipeline_mode<synchronous>, transform_indices = @transform_12, window_bounds = array<i64: 1, 256>}, {pipeline_mode = #tpu.pipeline_mode<synchronous>, transform_indices = @transform_13, window_bounds = array<i64: 256, 10>}, {pipeline_mode = #tpu.pipeline_mode<synchronous>, transform_indices = @transform_14, window_bounds = array<i64: 1, 10>}, {transform_indices = @transform_15, window_bounds = array<i64: 8, 10>}]} {
    %c0 = arith.constant 0 : index
    %c0_0 = arith.constant 0 : index
    %0 = vector.load %arg2[%c0, %c0_0] : memref<8x1xf32, #tpu.memory_space<vmem>>, vector<8x1xf32>
    %c0_1 = arith.constant 0 : index
    %c0_2 = arith.constant 0 : index
    %1 = vector.load %arg4[%c0_1, %c0_2] : memref<1x32xf32, #tpu.memory_space<vmem>>, vector<1x32xf32>
    %2 = vector.broadcast %0 : vector<8x1xf32> to vector<8x32xf32>
    %3 = vector.broadcast %1 : vector<1x32xf32> to vector<8x32xf32>
    %4 = arith.mulf %2, %3 : vector<8x32xf32>
    %c0_3 = arith.constant 0 : index
    %c0_4 = arith.constant 0 : index
    %5 = vector.load %arg5[%c0_3, %c0_4] : memref<1x32xf32, #tpu.memory_space<vmem>>, vector<1x32xf32>
    %6 = vector.broadcast %5 : vector<1x32xf32> to vector<8x32xf32>
    %7 = arith.addf %4, %6 : vector<8x32xf32>
    %cst = arith.constant 0.000000e+00 : f32
    %8 = vector.broadcast %cst : f32 to vector<8x32xf32>
    %9 = arith.maximumf %7, %8 : vector<8x32xf32>
    %c0_5 = arith.constant 0 : index
    %c0_6 = arith.constant 0 : index
    %10 = vector.load %arg6[%c0_5, %c0_6] : memref<32x32xf32, #tpu.memory_space<vmem>>, vector<32x32xf32>
    %cst_7 = arith.constant dense<0.000000e+00> : vector<8x32xf32>
    %11 = tpu.matmul %9, %10, %cst_7 {dimension_numbers = #tpu.dot_dimension_numbers<[1], [0], [0], [1], [0, 0, 1, 1], [], []>} : vector<8x32xf32>, vector<32x32xf32>, vector<8x32xf32> -> vector<8x32xf32>
    %c0_8 = arith.constant 0 : index
    %c0_9 = arith.constant 0 : index
    %12 = vector.load %arg7[%c0_8, %c0_9] : memref<1x32xf32, #tpu.memory_space<vmem>>, vector<1x32xf32>
    %13 = vector.broadcast %12 : vector<1x32xf32> to vector<8x32xf32>
    %14 = arith.addf %11, %13 : vector<8x32xf32>
    %15 = tpu.iota {dimensions = array<i32: 1>} : vector<8x128xi32>
    %c0_10 = arith.constant 0 : index
    %c0_11 = arith.constant 0 : index
    %16 = vector.load %arg3[%c0_10, %c0_11] : memref<8x1xi32, #tpu.memory_space<vmem>>, vector<8x1xi32>
    %c42_i32 = arith.constant 42 : i32
    %17 = vector.broadcast %c42_i32 : i32 to vector<8x1xi32>
    %18 = arith.addi %16, %17 : vector<8x1xi32>
    %19 = vector.broadcast %18 : vector<8x1xi32> to vector<8x128xi32>
    %20 = arith.cmpi eq, %15, %19 : vector<8x128xi32>
    %21 = arith.extui %20 : vector<8x128xi1> to vector<8x128xi32>
    %22 = arith.sitofp %21 : vector<8x128xi32> to vector<8x128xf32>
    %c0_12 = arith.constant 0 : index
    %c0_13 = arith.constant 0 : index
    %23 = vector.load %arg17[%c0_12, %c0_13] : memref<8x128xf32, #tpu.memory_space<vmem>>, vector<8x128xf32>
    tpu.vector_store %arg17[%c0_12, %c0_13], %22 {strides = array<i32>} : memref<8x128xf32, #tpu.memory_space<vmem>>, vector<8x128xf32>,
    %c0_14 = arith.constant 0 : index
    %c0_15 = arith.constant 0 : index
    %24 = vector.load %arg17[%c0_14, %c0_15] : memref<8x128xf32, #tpu.memory_space<vmem>>, vector<8x32xf32>
    tpu.vector_store %arg17[%c0_14, %c0_15], %14 {strides = array<i32>} : memref<8x128xf32, #tpu.memory_space<vmem>>, vector<8x32xf32>,
    %c0_16 = arith.constant 0 : index
    %c0_17 = arith.constant 0 : index
    %25 = vector.load %arg1[%c0_16, %c0_17] : memref<8x10xf32, #tpu.memory_space<vmem>>, vector<8x10xf32>
    %c0_18 = arith.constant 0 : index
    %c32 = arith.constant 32 : index
    %26 = vector.load %arg17[%c0_18, %c32] : memref<8x128xf32, #tpu.memory_space<vmem>>, vector<8x10xf32>
    tpu.vector_store %arg17[%c0_18, %c32], %25 {strides = array<i32>} : memref<8x128xf32, #tpu.memory_space<vmem>>, vector<8x10xf32>,
    %c0_19 = arith.constant 0 : index
    %c0_20 = arith.constant 0 : index
    %27 = vector.load %arg17[%c0_19, %c0_20] : memref<8x128xf32, #tpu.memory_space<vmem>>, vector<8x128xf32>
    %c0_21 = arith.constant 0 : index
    %c0_22 = arith.constant 0 : index
    %28 = vector.load %arg8[%c0_21, %c0_22] : memref<128x256xf32, #tpu.memory_space<vmem>>, vector<128x256xf32>
    %cst_23 = arith.constant dense<0.000000e+00> : vector<8x256xf32>
    %29 = tpu.matmul %27, %28, %cst_23 {dimension_numbers = #tpu.dot_dimension_numbers<[1], [0], [0], [1], [0, 0, 1, 1], [], []>} : vector<8x128xf32>, vector<128x256xf32>, vector<8x256xf32> -> vector<8x256xf32>
    %c0_24 = arith.constant 0 : index
    %c0_25 = arith.constant 0 : index
    %30 = vector.load %arg9[%c0_24, %c0_25] : memref<1x256xf32, #tpu.memory_space<vmem>>, vector<1x256xf32>
    %31 = vector.broadcast %30 : vector<1x256xf32> to vector<8x256xf32>
    %32 = arith.addf %29, %31 : vector<8x256xf32>
    %cst_26 = arith.constant 0.000000e+00 : f32
    %33 = vector.broadcast %cst_26 : f32 to vector<8x256xf32>
    %34 = arith.maximumf %32, %33 : vector<8x256xf32>
    %c0_27 = arith.constant 0 : index
    %c0_28 = arith.constant 0 : index
    %35 = vector.load %arg10[%c0_27, %c0_28] : memref<256x512xf32, #tpu.memory_space<vmem>>, vector<256x512xf32>
    %cst_29 = arith.constant dense<0.000000e+00> : vector<8x512xf32>
    %36 = tpu.matmul %34, %35, %cst_29 {dimension_numbers = #tpu.dot_dimension_numbers<[1], [0], [0], [1], [0, 0, 1, 1], [], []>} : vector<8x256xf32>, vector<256x512xf32>, vector<8x512xf32> -> vector<8x512xf32>
    %c0_30 = arith.constant 0 : index
    %c0_31 = arith.constant 0 : index
    %37 = vector.load %arg11[%c0_30, %c0_31] : memref<1x512xf32, #tpu.memory_space<vmem>>, vector<1x512xf32>
    %38 = vector.broadcast %37 : vector<1x512xf32> to vector<8x512xf32>
    %39 = arith.addf %36, %38 : vector<8x512xf32>
    %cst_32 = arith.constant 0.000000e+00 : f32
    %40 = vector.broadcast %cst_32 : f32 to vector<8x512xf32>
    %41 = arith.maximumf %39, %40 : vector<8x512xf32>
    %c0_33 = arith.constant 0 : index
    %c0_34 = arith.constant 0 : index
    %42 = vector.load %arg12[%c0_33, %c0_34] : memref<512x256xf32, #tpu.memory_space<vmem>>, vector<512x256xf32>
    %cst_35 = arith.constant dense<0.000000e+00> : vector<8x256xf32>
    %43 = tpu.matmul %41, %42, %cst_35 {dimension_numbers = #tpu.dot_dimension_numbers<[1], [0], [0], [1], [0, 0, 1, 1], [], []>} : vector<8x512xf32>, vector<512x256xf32>, vector<8x256xf32> -> vector<8x256xf32>
    %c0_36 = arith.constant 0 : index
    %c0_37 = arith.constant 0 : index
    %44 = vector.load %arg13[%c0_36, %c0_37] : memref<1x256xf32, #tpu.memory_space<vmem>>, vector<1x256xf32>
    %45 = vector.broadcast %44 : vector<1x256xf32> to vector<8x256xf32>
    %46 = arith.addf %43, %45 : vector<8x256xf32>
    %cst_38 = arith.constant 0.000000e+00 : f32
    %47 = vector.broadcast %cst_38 : f32 to vector<8x256xf32>
    %48 = arith.maximumf %46, %47 : vector<8x256xf32>
    %c0_39 = arith.constant 0 : index
    %c0_40 = arith.constant 0 : index
    %49 = vector.load %arg14[%c0_39, %c0_40] : memref<256x10xf32, #tpu.memory_space<vmem>>, vector<256x10xf32>
    %cst_41 = arith.constant dense<0.000000e+00> : vector<8x10xf32>
    %50 = tpu.matmul %48, %49, %cst_41 {dimension_numbers = #tpu.dot_dimension_numbers<[1], [0], [0], [1], [0, 0, 1, 1], [], []>} : vector<8x256xf32>, vector<256x10xf32>, vector<8x10xf32> -> vector<8x10xf32>
    %c0_42 = arith.constant 0 : index
    %c0_43 = arith.constant 0 : index
    %51 = vector.load %arg15[%c0_42, %c0_43] : memref<1x10xf32, #tpu.memory_space<vmem>>, vector<1x10xf32>
    %52 = vector.broadcast %51 : vector<1x10xf32> to vector<8x10xf32>
    %53 = arith.addf %50, %52 : vector<8x10xf32>
    %c0_44 = arith.constant 0 : index
    %c0_45 = arith.constant 0 : index
    %54 = vector.load %arg16[%c0_44, %c0_45] : memref<8x10xf32, #tpu.memory_space<vmem>>, vector<8x10xf32>
    tpu.vector_store %arg16[%c0_44, %c0_45], %53 {strides = array<i32>} : memref<8x10xf32, #tpu.memory_space<vmem>>, vector<8x10xf32>,
    return
  }
  func.func @transform_0(%arg0: i32) -> (i32, i32) {
    %c0_i32 = arith.constant 0 : i32
    %c0_i32_0 = arith.constant 0 : i32
    return %arg0, %c0_i32 : i32, i32
  }
  func.func @transform_1(%arg0: i32) -> (i32, i32) {
    %c0_i32 = arith.constant 0 : i32
    %c0_i32_0 = arith.constant 0 : i32
    return %arg0, %c0_i32 : i32, i32
  }
  func.func @transform_2(%arg0: i32) -> (i32, i32) {
    %c0_i32 = arith.constant 0 : i32
    %c0_i32_0 = arith.constant 0 : i32
    return %arg0, %c0_i32 : i32, i32
  }
  func.func @transform_3(%arg0: i32) -> (i32, i32) {
    %c0_i32 = arith.constant 0 : i32
    %c0_i32_0 = arith.constant 0 : i32
    %c0_i32_1 = arith.constant 0 : i32
    return %c0_i32, %c0_i32_0 : i32, i32
  }
  func.func @transform_4(%arg0: i32) -> (i32, i32) {
    %c0_i32 = arith.constant 0 : i32
    %c0_i32_0 = arith.constant 0 : i32
    %c0_i32_1 = arith.constant 0 : i32
    return %c0_i32, %c0_i32_0 : i32, i32
  }
  func.func @transform_5(%arg0: i32) -> (i32, i32) {
    %c0_i32 = arith.constant 0 : i32
    %c0_i32_0 = arith.constant 0 : i32
    %c0_i32_1 = arith.constant 0 : i32
    return %c0_i32, %c0_i32_0 : i32, i32
  }
  func.func @transform_6(%arg0: i32) -> (i32, i32) {
    %c0_i32 = arith.constant 0 : i32
    %c0_i32_0 = arith.constant 0 : i32
    %c0_i32_1 = arith.constant 0 : i32
    return %c0_i32, %c0_i32_0 : i32, i32
  }
  func.func @transform_7(%arg0: i32) -> (i32, i32) {
    %c0_i32 = arith.constant 0 : i32
    %c0_i32_0 = arith.constant 0 : i32
    %c0_i32_1 = arith.constant 0 : i32
    return %c0_i32, %c0_i32_0 : i32, i32
  }
  func.func @transform_8(%arg0: i32) -> (i32, i32) {
    %c0_i32 = arith.constant 0 : i32
    %c0_i32_0 = arith.constant 0 : i32
    %c0_i32_1 = arith.constant 0 : i32
    return %c0_i32, %c0_i32_0 : i32, i32
  }
  func.func @transform_9(%arg0: i32) -> (i32, i32) {
    %c0_i32 = arith.constant 0 : i32
    %c0_i32_0 = arith.constant 0 : i32
    %c0_i32_1 = arith.constant 0 : i32
    return %c0_i32, %c0_i32_0 : i32, i32
  }
  func.func @transform_10(%arg0: i32) -> (i32, i32) {
    %c0_i32 = arith.constant 0 : i32
    %c0_i32_0 = arith.constant 0 : i32
    %c0_i32_1 = arith.constant 0 : i32
    return %c0_i32, %c0_i32_0 : i32, i32
  }
  func.func @transform_11(%arg0: i32) -> (i32, i32) {
    %c0_i32 = arith.constant 0 : i32
    %c0_i32_0 = arith.constant 0 : i32
    %c0_i32_1 = arith.constant 0 : i32
    return %c0_i32, %c0_i32_0 : i32, i32
  }
  func.func @transform_12(%arg0: i32) -> (i32, i32) {
    %c0_i32 = arith.constant 0 : i32
    %c0_i32_0 = arith.constant 0 : i32
    %c0_i32_1 = arith.constant 0 : i32
    return %c0_i32, %c0_i32_0 : i32, i32
  }
  func.func @transform_13(%arg0: i32) -> (i32, i32) {
    %c0_i32 = arith.constant 0 : i32
    %c0_i32_0 = arith.constant 0 : i32
    %c0_i32_1 = arith.constant 0 : i32
    return %c0_i32, %c0_i32_0 : i32, i32
  }
  func.func @transform_14(%arg0: i32) -> (i32, i32) {
    %c0_i32 = arith.constant 0 : i32
    %c0_i32_0 = arith.constant 0 : i32
    %c0_i32_1 = arith.constant 0 : i32
    return %c0_i32, %c0_i32_0 : i32, i32
  }
  func.func @transform_15(%arg0: i32) -> (i32, i32) {
    %c0_i32 = arith.constant 0 : i32
    %c0_i32_0 = arith.constant 0 : i32
    return %arg0, %c0_i32 : i32, i32
  }
}

</mosaic_0001>

<llo_original>
// kernel: tpu_custom_call.1
$region0: #{tpu_custom_call.1}
  #allocation0 [shape = 'u32[]', space=smem, size = 0x4, offset = 0x4, fixed_abs, tag = 'smem constant byte address 0x4 - core index']
  #allocation1 [shape = 'u32[144,128]{1,0:T(1,128)}', space=vmem, size = 0x12000, scoped, tag = 'internal scratch']
  #allocation2 [shape = 'f32[8,128]{1,0:T(8,128)}', space=vmem, size = 0x1000, scoped, tag = 'scratch operand']
  %s0 = inlined_call_operand.vmem [shape: f32[32,10], index: 0, kind: input, shape index: {}]
  %s1 = inlined_call_operand.vmem [shape: f32[32,1], index: 1, kind: input, shape index: {}]
  %s2 = inlined_call_operand.vmem [shape: s32[32,1], index: 2, kind: input, shape index: {}]
  %s3 = inlined_call_operand.vmem [shape: f32[1,32], index: 3, kind: input, shape index: {}]
  %s4 = inlined_call_operand.vmem [shape: f32[1,32], index: 4, kind: input, shape index: {}]
  %s5 = inlined_call_operand.vmem [shape: f32[32,32], index: 5, kind: input, shape index: {}]
  %s6 = inlined_call_operand.vmem [shape: f32[1,32], index: 6, kind: input, shape index: {}]
  %s7 = inlined_call_operand.vmem [shape: f32[128,256], index: 7, kind: input, shape index: {}]
  %s8 = inlined_call_operand.vmem [shape: f32[1,256], index: 8, kind: input, shape index: {}]
  %s9 = inlined_call_operand.hbm [shape: f32[256,512], index: 9, kind: input, shape index: {}]
  %s10 = inlined_call_operand.vmem [shape: f32[1,512], index: 10, kind: input, shape index: {}]
  %s11 = inlined_call_operand.hbm [shape: f32[512,256], index: 11, kind: input, shape index: {}]
  %s12 = inlined_call_operand.vmem [shape: f32[1,256], index: 12, kind: input, shape index: {}]
  %s13 = inlined_call_operand.vmem [shape: f32[256,10], index: 13, kind: input, shape index: {}]
  %s14 = inlined_call_operand.vmem [shape: f32[1,10], index: 14, kind: input, shape index: {}]
  %s15 = inlined_call_operand.vmem [shape: f32[32,10], index: 15, kind: output, shape index: {}]
  %s16 = sld [smem:[#allocation0]]
  $region101: #{tpu_custom_call.1} parent=0
    _
  %s18 = ssub.s32 1, %s16
  %s19 = scalar_select 0, %s18, %s16
  $region1: #{tpu_custom_call.1} parent=0
    #allocation3 [shape = 'u8[524288]{0}', space=vmem, size = 0x80000, scoped, tag = 'input window, operand 9, single buffered']
    #allocation4 [shape = 's32[2]{0}', space=sflag, size = 0x8, scoped, tag = 'scoped memory for tpu_custom_call.1']
    #allocation5 [shape = 'u8[524288]{0}', space=vmem, size = 0x80000, scoped, tag = 'input window, operand 11, single buffered']
    #allocation6 [shape = 's32[1]{0}', space=sflag, size = 0x4, scoped, tag = 'scoped memory for tpu_custom_call.1']
    %20 = vsyncpa [#allocation4], 0
    %21 = vsyncpa [#allocation6], 0
    loop: start=0, step=1, limit=6
    $region2: #{tpu_custom_call.1} parent=1 // loop_pre_header
      _
    $region3: #{tpu_custom_call.1} parent=1 // loop_header
      %s23 = sphi 0, %s27
      %p24 = scmp.ge.s32.totalorder %s23, 6
      %s33 = sphi 0, %s35
      %s36 = sphi 0, %s33
      %s37 = sphi 0, %s36
      %s53 = sphi 0, %s37
      %s59 = sphi 0, %s61
      %s62 = sphi 0, %s59
      %s63 = sphi 0, %s62
      %s79 = sphi 0, %s63
      %s85 = sphi 0, %s87
      %s88 = sphi 0, %s85
      %s89 = sphi 0, %s88
      %s105 = sphi 0, %s89
      %s109 = sphi 0, %s109
      %s111 = sphi 0, %s109
      %s112 = sphi 0, %s111
      %s126 = sphi 0, %s112
      %s130 = sphi 0, %s130
      %s132 = sphi 0, %s130
      %s133 = sphi 0, %s132
      %s147 = sphi 0, %s133
      %s151 = sphi 0, %s151
      %s153 = sphi 0, %s151
      %s154 = sphi 0, %s153
      %s168 = sphi 0, %s154
      %s172 = sphi 0, %s172
      %s174 = sphi 0, %s172
      %s175 = sphi 0, %s174
      %s189 = sphi 0, %s175
      %s193 = sphi 0, %s193
      %s195 = sphi 0, %s193
      %s196 = sphi 0, %s195
      %s210 = sphi 0, %s196
      %s214 = sphi 0, %s214
      %s216 = sphi 0, %s214
      %s217 = sphi 0, %s216
      %s231 = sphi 0, %s217
      %s235 = sphi 0, %s235
      %s237 = sphi 0, %s235
      %s238 = sphi 0, %s237
      %s252 = sphi 0, %s238
      %s256 = sphi 0, %s256
      %s258 = sphi 0, %s256
      %s259 = sphi 0, %s258
      %s273 = sphi 0, %s259
      %s277 = sphi 0, %s277
      %s279 = sphi 0, %s277
      %s280 = sphi 0, %s279
      %s294 = sphi 0, %s280
      %s298 = sphi 0, %s298
      %s300 = sphi 0, %s298
      %s301 = sphi 0, %s300
      %s315 = sphi 0, %s301
      %s319 = sphi 0, %s319
      %s321 = sphi 0, %s319
      %s322 = sphi 0, %s321
      %s336 = sphi 0, %s322
      %s340 = sphi 0, %s340
      %s342 = sphi 0, %s340
      %s343 = sphi 0, %s342
      %s357 = sphi 0, %s343
      %s363 = sphi 0, %s365
      %s366 = sphi 0, %s363
      %s367 = sphi 0, %s366
      %s383 = sphi 0, %s367
    $region4: #{tpu_custom_call.1} parent=1 // loop_header_branch
      %26 = sbr.rel (%p24) target = $region8
    $region5: #{tpu_custom_call.1} parent=1 // loop_body
      %s28 = ssub.s32 %s23, 1
      %s29 = ssub.s32 %s23, 2
      %s30 = sadd.s32 %s23, 1
      %s31 = ssub.s32 %s23, %s30
      %p32 = scmp.eq.s32.totalorder %s31, 0
      %s34 = sadd.s32 %s33, 1
      %s35 = scalar_select %p32, %s33, %s34
      %p38 = pneg %p32
      %p39 = scmp.eq.s32.totalorder %s23, 3
      %p40 = por %p38, %p39
      %p41 = scmp.ne.s32.totalorder %s33, %s36
      %p42 = scmp.eq.s32.totalorder %s23, 0
      %p43 = por %p41, %p42
      %p44 = scmp.ne.s32.totalorder %s33, %s36
      %p45 = scmp.eq.s32.totalorder %s28, 3
      %p46 = por %p44, %p45
      %p47 = scmp.ne.s32.totalorder %s36, %s37
      %p48 = scmp.eq.s32.totalorder %s28, 0
      %p49 = por %p47, %p48
      %p50 = scmp.ne.s32.totalorder %s36, %s37
      %p51 = scmp.eq.s32.totalorder %s29, 3
      %p52 = por %p50, %p51
      %p54 = scmp.ne.s32.totalorder %s37, %s53
      %p55 = scmp.eq.s32.totalorder %s29, 0
      %p56 = por %p54, %p55
      %s57 = ssub.s32 %s23, %s30
      %p58 = scmp.eq.s32.totalorder %s57, 0
      %s60 = sadd.s32 %s59, 1
      %s61 = scalar_select %p58, %s59, %s60
      %p64 = pneg %p58
      %p65 = scmp.eq.s32.totalorder %s23, 3
      %p66 = por %p64, %p65
      %p67 = scmp.ne.s32.totalorder %s59, %s62
      %p68 = scmp.eq.s32.totalorder %s23, 0
      %p69 = por %p67, %p68
      %p70 = scmp.ne.s32.totalorder %s59, %s62
      %p71 = scmp.eq.s32.totalorder %s28, 3
      %p72 = por %p70, %p71
      %p73 = scmp.ne.s32.totalorder %s62, %s63
      %p74 = scmp.eq.s32.totalorder %s28, 0
      %p75 = por %p73, %p74
      %p76 = scmp.ne.s32.totalorder %s62, %s63
      %p77 = scmp.eq.s32.totalorder %s29, 3
      %p78 = por %p76, %p77
      %p80 = scmp.ne.s32.totalorder %s63, %s79
      %p81 = scmp.eq.s32.totalorder %s29, 0
      %p82 = por %p80, %p81
      %s83 = ssub.s32 %s23, %s30
      %p84 = scmp.eq.s32.totalorder %s83, 0
      %s86 = sadd.s32 %s85, 1
      %s87 = scalar_select %p84, %s85, %s86
      %p90 = pneg %p84
      %p91 = scmp.eq.s32.totalorder %s23, 3
      %p92 = por %p90, %p91
      %p93 = scmp.ne.s32.totalorder %s85, %s88
      %p94 = scmp.eq.s32.totalorder %s23, 0
      %p95 = por %p93, %p94
      %p96 = scmp.ne.s32.totalorder %s85, %s88
      %p97 = scmp.eq.s32.totalorder %s28, 3
      %p98 = por %p96, %p97
      %p99 = scmp.ne.s32.totalorder %s88, %s89
      %p100 = scmp.eq.s32.totalorder %s28, 0
      %p101 = por %p99, %p100
      %p102 = scmp.ne.s32.totalorder %s88, %s89
      %p103 = scmp.eq.s32.totalorder %s29, 3
      %p104 = por %p102, %p103
      %p106 = scmp.ne.s32.totalorder %s89, %s105
      %p107 = scmp.eq.s32.totalorder %s29, 0
      %p108 = por %p106, %p107
      %s110 = sadd.s32 %s109, 1
      %p113 = scmp.eq.s32.totalorder %s23, 3
      %p114 = scmp.ne.s32.totalorder %s109, %s111
      %p115 = scmp.eq.s32.totalorder %s23, 0
      %p116 = por %p114, %p115
      %p117 = scmp.ne.s32.totalorder %s109, %s111
      %p118 = scmp.eq.s32.totalorder %s28, 3
      %p119 = por %p117, %p118
      %p120 = scmp.ne.s32.totalorder %s111, %s112
      %p121 = scmp.eq.s32.totalorder %s28, 0
      %p122 = por %p120, %p121
      %p123 = scmp.ne.s32.totalorder %s111, %s112
      %p124 = scmp.eq.s32.totalorder %s29, 3
      %p125 = por %p123, %p124
      %p127 = scmp.ne.s32.totalorder %s112, %s126
      %p128 = scmp.eq.s32.totalorder %s29, 0
      %p129 = por %p127, %p128
      %s131 = sadd.s32 %s130, 1
      %p134 = scmp.eq.s32.totalorder %s23, 3
      %p135 = scmp.ne.s32.totalorder %s130, %s132
      %p136 = scmp.eq.s32.totalorder %s23, 0
      %p137 = por %p135, %p136
      %p138 = scmp.ne.s32.totalorder %s130, %s132
      %p139 = scmp.eq.s32.totalorder %s28, 3
      %p140 = por %p138, %p139
      %p141 = scmp.ne.s32.totalorder %s132, %s133
      %p142 = scmp.eq.s32.totalorder %s28, 0
      %p143 = por %p141, %p142
      %p144 = scmp.ne.s32.totalorder %s132, %s133
      %p145 = scmp.eq.s32.totalorder %s29, 3
      %p146 = por %p144, %p145
      %p148 = scmp.ne.s32.totalorder %s133, %s147
      %p149 = scmp.eq.s32.totalorder %s29, 0
      %p150 = por %p148, %p149
      %s152 = sadd.s32 %s151, 1
      %p155 = scmp.eq.s32.totalorder %s23, 3
      %p156 = scmp.ne.s32.totalorder %s151, %s153
      %p157 = scmp.eq.s32.totalorder %s23, 0
      %p158 = por %p156, %p157
      %p159 = scmp.ne.s32.totalorder %s151, %s153
      %p160 = scmp.eq.s32.totalorder %s28, 3
      %p161 = por %p159, %p160
      %p162 = scmp.ne.s32.totalorder %s153, %s154
      %p163 = scmp.eq.s32.totalorder %s28, 0
      %p164 = por %p162, %p163
      %p165 = scmp.ne.s32.totalorder %s153, %s154
      %p166 = scmp.eq.s32.totalorder %s29, 3
      %p167 = por %p165, %p166
      %p169 = scmp.ne.s32.totalorder %s154, %s168
      %p170 = scmp.eq.s32.totalorder %s29, 0
      %p171 = por %p169, %p170
      %s173 = sadd.s32 %s172, 1
      %p176 = scmp.eq.s32.totalorder %s23, 3
      %p177 = scmp.ne.s32.totalorder %s172, %s174
      %p178 = scmp.eq.s32.totalorder %s23, 0
      %p179 = por %p177, %p178
      %p180 = scmp.ne.s32.totalorder %s172, %s174
      %p181 = scmp.eq.s32.totalorder %s28, 3
      %p182 = por %p180, %p181
      %p183 = scmp.ne.s32.totalorder %s174, %s175
      %p184 = scmp.eq.s32.totalorder %s28, 0
      %p185 = por %p183, %p184
      %p186 = scmp.ne.s32.totalorder %s174, %s175
      %p187 = scmp.eq.s32.totalorder %s29, 3
      %p188 = por %p186, %p187
      %p190 = scmp.ne.s32.totalorder %s175, %s189
      %p191 = scmp.eq.s32.totalorder %s29, 0
      %p192 = por %p190, %p191
      %s194 = sadd.s32 %s193, 1
      %p197 = scmp.eq.s32.totalorder %s23, 3
      %p198 = scmp.ne.s32.totalorder %s193, %s195
      %p199 = scmp.eq.s32.totalorder %s23, 0
      %p200 = por %p198, %p199
      %p201 = scmp.ne.s32.totalorder %s193, %s195
      %p202 = scmp.eq.s32.totalorder %s28, 3
      %p203 = por %p201, %p202
      %p204 = scmp.ne.s32.totalorder %s195, %s196
      %p205 = scmp.eq.s32.totalorder %s28, 0
      %p206 = por %p204, %p205
      %p207 = scmp.ne.s32.totalorder %s195, %s196
      %p208 = scmp.eq.s32.totalorder %s29, 3
      %p209 = por %p207, %p208
      %p211 = scmp.ne.s32.totalorder %s196, %s210
      %p212 = scmp.eq.s32.totalorder %s29, 0
      %p213 = por %p211, %p212
      %s215 = sadd.s32 %s214, 1
      %p218 = scmp.eq.s32.totalorder %s23, 3
      %p219 = scmp.ne.s32.totalorder %s214, %s216
      %p220 = scmp.eq.s32.totalorder %s23, 0
      %p221 = por %p219, %p220
      %p222 = scmp.ne.s32.totalorder %s214, %s216
      %p223 = scmp.eq.s32.totalorder %s28, 3
      %p224 = por %p222, %p223
      %p225 = scmp.ne.s32.totalorder %s216, %s217
      %p226 = scmp.eq.s32.totalorder %s28, 0
      %p227 = por %p225, %p226
      %p228 = scmp.ne.s32.totalorder %s216, %s217
      %p229 = scmp.eq.s32.totalorder %s29, 3
      %p230 = por %p228, %p229
      %p232 = scmp.ne.s32.totalorder %s217, %s231
      %p233 = scmp.eq.s32.totalorder %s29, 0
      %p234 = por %p232, %p233
      %s236 = sadd.s32 %s235, 1
      %p239 = scmp.eq.s32.totalorder %s23, 3
      %p240 = scmp.ne.s32.totalorder %s235, %s237
      %p241 = scmp.eq.s32.totalorder %s23, 0
      %p242 = por %p240, %p241
      %p243 = scmp.ne.s32.totalorder %s235, %s237
      %p244 = scmp.eq.s32.totalorder %s28, 3
      %p245 = por %p243, %p244
      %p246 = scmp.ne.s32.totalorder %s237, %s238
      %p247 = scmp.eq.s32.totalorder %s28, 0
      %p248 = por %p246, %p247
      %p249 = scmp.ne.s32.totalorder %s237, %s238
      %p250 = scmp.eq.s32.totalorder %s29, 3
      %p251 = por %p249, %p250
      %p253 = scmp.ne.s32.totalorder %s238, %s252
      %p254 = scmp.eq.s32.totalorder %s29, 0
      %p255 = por %p253, %p254
      %s257 = sadd.s32 %s256, 1
      %p260 = scmp.eq.s32.totalorder %s23, 3
      %p261 = scmp.ne.s32.totalorder %s256, %s258
      %p262 = scmp.eq.s32.totalorder %s23, 0
      %p263 = por %p261, %p262
      %p264 = scmp.ne.s32.totalorder %s256, %s258
      %p265 = scmp.eq.s32.totalorder %s28, 3
      %p266 = por %p264, %p265
      %p267 = scmp.ne.s32.totalorder %s258, %s259
      %p268 = scmp.eq.s32.totalorder %s28, 0
      %p269 = por %p267, %p268
      %p270 = scmp.ne.s32.totalorder %s258, %s259
      %p271 = scmp.eq.s32.totalorder %s29, 3
      %p272 = por %p270, %p271
      %p274 = scmp.ne.s32.totalorder %s259, %s273
      %p275 = scmp.eq.s32.totalorder %s29, 0
      %p276 = por %p274, %p275
      %s278 = sadd.s32 %s277, 1
      %p281 = scmp.eq.s32.totalorder %s23, 3
      %p282 = scmp.ne.s32.totalorder %s277, %s279
      %p283 = scmp.eq.s32.totalorder %s23, 0
      %p284 = por %p282, %p283
      %p285 = scmp.ne.s32.totalorder %s277, %s279
      %p286 = scmp.eq.s32.totalorder %s28, 3
      %p287 = por %p285, %p286
      %p288 = scmp.ne.s32.totalorder %s279, %s280
      %p289 = scmp.eq.s32.totalorder %s28, 0
      %p290 = por %p288, %p289
      %p291 = scmp.ne.s32.totalorder %s279, %s280
      %p292 = scmp.eq.s32.totalorder %s29, 3
      %p293 = por %p291, %p292
      %p295 = scmp.ne.s32.totalorder %s280, %s294
      %p296 = scmp.eq.s32.totalorder %s29, 0
      %p297 = por %p295, %p296
      %s299 = sadd.s32 %s298, 1
      %p302 = scmp.eq.s32.totalorder %s23, 3
      %p303 = scmp.ne.s32.totalorder %s298, %s300
      %p304 = scmp.eq.s32.totalorder %s23, 0
      %p305 = por %p303, %p304
      %p306 = scmp.ne.s32.totalorder %s298, %s300
      %p307 = scmp.eq.s32.totalorder %s28, 3
      %p308 = por %p306, %p307
      %p309 = scmp.ne.s32.totalorder %s300, %s301
      %p310 = scmp.eq.s32.totalorder %s28, 0
      %p311 = por %p309, %p310
      %p312 = scmp.ne.s32.totalorder %s300, %s301
      %p313 = scmp.eq.s32.totalorder %s29, 3
      %p314 = por %p312, %p313
      %p316 = scmp.ne.s32.totalorder %s301, %s315
      %p317 = scmp.eq.s32.totalorder %s29, 0
      %p318 = por %p316, %p317
      %s320 = sadd.s32 %s319, 1
      %p323 = scmp.eq.s32.totalorder %s23, 3
      %p324 = scmp.ne.s32.totalorder %s319, %s321
      %p325 = scmp.eq.s32.totalorder %s23, 0
      %p326 = por %p324, %p325
      %p327 = scmp.ne.s32.totalorder %s319, %s321
      %p328 = scmp.eq.s32.totalorder %s28, 3
      %p329 = por %p327, %p328
      %p330 = scmp.ne.s32.totalorder %s321, %s322
      %p331 = scmp.eq.s32.totalorder %s28, 0
      %p332 = por %p330, %p331
      %p333 = scmp.ne.s32.totalorder %s321, %s322
      %p334 = scmp.eq.s32.totalorder %s29, 3
      %p335 = por %p333, %p334
      %p337 = scmp.ne.s32.totalorder %s322, %s336
      %p338 = scmp.eq.s32.totalorder %s29, 0
      %p339 = por %p337, %p338
      %s341 = sadd.s32 %s340, 1
      %p344 = scmp.eq.s32.totalorder %s23, 3
      %p345 = scmp.ne.s32.totalorder %s340, %s342
      %p346 = scmp.eq.s32.totalorder %s23, 0
      %p347 = por %p345, %p346
      %p348 = scmp.ne.s32.totalorder %s340, %s342
      %p349 = scmp.eq.s32.totalorder %s28, 3
      %p350 = por %p348, %p349
      %p351 = scmp.ne.s32.totalorder %s342, %s343
      %p352 = scmp.eq.s32.totalorder %s28, 0
      %p353 = por %p351, %p352
      %p354 = scmp.ne.s32.totalorder %s342, %s343
      %p355 = scmp.eq.s32.totalorder %s29, 3
      %p356 = por %p354, %p355
      %p358 = scmp.ne.s32.totalorder %s343, %s357
      %p359 = scmp.eq.s32.totalorder %s29, 0
      %p360 = por %p358, %p359
      %s361 = ssub.s32 %s23, %s30
      %p362 = scmp.eq.s32.totalorder %s361, 0
      %s364 = sadd.s32 %s363, 1
      %s365 = scalar_select %p362, %s363, %s364
      %p368 = pneg %p362
      %p369 = scmp.eq.s32.totalorder %s23, 3
      %p370 = por %p368, %p369
      %p371 = scmp.ne.s32.totalorder %s363, %s366
      %p372 = scmp.eq.s32.totalorder %s23, 0
      %p373 = por %p371, %p372
      %p374 = scmp.ne.s32.totalorder %s363, %s366
      %p375 = scmp.eq.s32.totalorder %s28, 3
      %p376 = por %p374, %p375
      %p377 = scmp.ne.s32.totalorder %s366, %s367
      %p378 = scmp.eq.s32.totalorder %s28, 0
      %p379 = por %p377, %p378
      %p380 = scmp.ne.s32.totalorder %s366, %s367
      %p381 = scmp.eq.s32.totalorder %s29, 3
      %p382 = por %p380, %p381
      %p384 = scmp.ne.s32.totalorder %s367, %s383
      %p385 = scmp.eq.s32.totalorder %s29, 0
      %p386 = por %p384, %p385
      %p387 = scmp.le.s32.totalorder 1, %s23
      %p388 = scmp.lt.s32.totalorder %s23, 5
      %p389 = pnand %p387, %p388
      %p390 = pneg %p389
      // Predicated region
      $region9: #{tpu_custom_call.1} parent=5 // pred_check
        _
      $region10: #{tpu_custom_call.1} parent=5 // pred_check_branch
        %392 = sbr.rel (%p389) target = $region12
      $region11: #{tpu_custom_call.1} parent=5 // pred_region
        %s393 = ssub.s32 %s23, 1
        // Predicated region
        $region13: #{tpu_custom_call.1} parent=11 // pred_check
          %p394 = pneg %p122
        $region14: #{tpu_custom_call.1} parent=11 // pred_check_branch
          %396 = sbr.rel (%p394) target = $region16
        $region15: #{tpu_custom_call.1} parent=11 // pred_region
          _
        $region16: #{tpu_custom_call.1} parent=11 // pred_fallthru
          _
        // Predicated region
        $region17: #{tpu_custom_call.1} parent=11 // pred_check
          %p397 = pneg %p143
        $region18: #{tpu_custom_call.1} parent=11 // pred_check_branch
          %399 = sbr.rel (%p397) target = $region20
        $region19: #{tpu_custom_call.1} parent=11 // pred_region
          _
        $region20: #{tpu_custom_call.1} parent=11 // pred_fallthru
          _
        // Predicated region
        $region21: #{tpu_custom_call.1} parent=11 // pred_check
          %p400 = pneg %p164
        $region22: #{tpu_custom_call.1} parent=11 // pred_check_branch
          %402 = sbr.rel (%p400) target = $region24
        $region23: #{tpu_custom_call.1} parent=11 // pred_region
          _
        $region24: #{tpu_custom_call.1} parent=11 // pred_fallthru
          _
        // Predicated region
        $region25: #{tpu_custom_call.1} parent=11 // pred_check
          %p403 = pneg %p185
        $region26: #{tpu_custom_call.1} parent=11 // pred_check_branch
          %405 = sbr.rel (%p403) target = $region28
        $region27: #{tpu_custom_call.1} parent=11 // pred_region
          _
        $region28: #{tpu_custom_call.1} parent=11 // pred_fallthru
          _
        // Predicated region
        $region29: #{tpu_custom_call.1} parent=11 // pred_check
          %p406 = pneg %p206
        $region30: #{tpu_custom_call.1} parent=11 // pred_check_branch
          %408 = sbr.rel (%p406) target = $region32
        $region31: #{tpu_custom_call.1} parent=11 // pred_region
          _
        $region32: #{tpu_custom_call.1} parent=11 // pred_fallthru
          _
        // Predicated region
        $region33: #{tpu_custom_call.1} parent=11 // pred_check
          %p409 = pneg %p227
        $region34: #{tpu_custom_call.1} parent=11 // pred_check_branch
          %411 = sbr.rel (%p409) target = $region36
        $region35: #{tpu_custom_call.1} parent=11 // pred_region
          _
        $region36: #{tpu_custom_call.1} parent=11 // pred_fallthru
          _
        // Predicated region
        $region37: #{tpu_custom_call.1} parent=11 // pred_check
          %p412 = pneg %p248
        $region38: #{tpu_custom_call.1} parent=11 // pred_check_branch
          %414 = sbr.rel (%p412) target = $region40
        $region39: #{tpu_custom_call.1} parent=11 // pred_region
          %s416 = ssub.s32 16384, 16384
          %417 = vsyncadd [#allocation4], %s416
          %s418 = sshll.u32 [#allocation3], 4
          %s419 = int_to_ptr.vmem [resolvable:$true] %s418
          %424 = dma.hbm_to_vmem [thread:$0]  %s9, 16384, %s419, [#allocation4], 512, 512, 32
        $region40: #{tpu_custom_call.1} parent=11 // pred_fallthru
          _
        // Predicated region
        $region41: #{tpu_custom_call.1} parent=11 // pred_check
          %p425 = pneg %p269
        $region42: #{tpu_custom_call.1} parent=11 // pred_check_branch
          %427 = sbr.rel (%p425) target = $region44
        $region43: #{tpu_custom_call.1} parent=11 // pred_region
          _
        $region44: #{tpu_custom_call.1} parent=11 // pred_fallthru
          _
        // Predicated region
        $region45: #{tpu_custom_call.1} parent=11 // pred_check
          %p428 = pneg %p290
        $region46: #{tpu_custom_call.1} parent=11 // pred_check_branch
          %430 = sbr.rel (%p428) target = $region48
        $region47: #{tpu_custom_call.1} parent=11 // pred_region
          %s432 = ssub.s32 16384, 16384
          %433 = vsyncadd [#allocation6], %s432
          %s434 = sshll.u32 [#allocation5], 4
          %s435 = int_to_ptr.vmem [resolvable:$true] %s434
          %440 = dma.hbm_to_vmem [thread:$0]  %s11, 16384, %s435, [#allocation6], 256, 256, 16
        $region48: #{tpu_custom_call.1} parent=11 // pred_fallthru
          _
        // Predicated region
        $region49: #{tpu_custom_call.1} parent=11 // pred_check
          %p441 = pneg %p311
        $region50: #{tpu_custom_call.1} parent=11 // pred_check_branch
          %443 = sbr.rel (%p441) target = $region52
        $region51: #{tpu_custom_call.1} parent=11 // pred_region
          _
        $region52: #{tpu_custom_call.1} parent=11 // pred_fallthru
          _
        // Predicated region
        $region53: #{tpu_custom_call.1} parent=11 // pred_check
          %p444 = pneg %p332
        $region54: #{tpu_custom_call.1} parent=11 // pred_check_branch
          %446 = sbr.rel (%p444) target = $region56
        $region55: #{tpu_custom_call.1} parent=11 // pred_region
          _
        $region56: #{tpu_custom_call.1} parent=11 // pred_fallthru
          _
        // Predicated region
        $region57: #{tpu_custom_call.1} parent=11 // pred_check
          %p447 = pneg %p353
        $region58: #{tpu_custom_call.1} parent=11 // pred_check_branch
          %449 = sbr.rel (%p447) target = $region60
        $region59: #{tpu_custom_call.1} parent=11 // pred_region
          _
        $region60: #{tpu_custom_call.1} parent=11 // pred_fallthru
          _
      $region12: #{tpu_custom_call.1} parent=5 // pred_fallthru
        _
      %p450 = scmp.lt.s32.totalorder %s23, 4
      // Predicated region
      $region61: #{tpu_custom_call.1} parent=5 // pred_check
        %p451 = pneg %p450
      $region62: #{tpu_custom_call.1} parent=5 // pred_check_branch
        %453 = sbr.rel (%p451) target = $region64
      $region63: #{tpu_custom_call.1} parent=5 // pred_region
        // Predicated region
        $region65: #{tpu_custom_call.1} parent=63 // pred_check
          %p454 = pneg %p43
        $region66: #{tpu_custom_call.1} parent=63 // pred_check_branch
          %456 = sbr.rel (%p454) target = $region68
        $region67: #{tpu_custom_call.1} parent=63 // pred_region
          %p457 = scmp.lt.s32.totalorder %s23, 3
          %s458 = scalar_select %p457, %s23, 3
          %s459 = smul.addr %s458, 8
          %s460 = scalar_lea.vmem %s0, %s459
        $region68: #{tpu_custom_call.1} parent=63 // pred_fallthru
          _
        // Predicated region
        $region69: #{tpu_custom_call.1} parent=63 // pred_check
          %p461 = pneg %p69
        $region70: #{tpu_custom_call.1} parent=63 // pred_check_branch
          %463 = sbr.rel (%p461) target = $region72
        $region71: #{tpu_custom_call.1} parent=63 // pred_region
          %p464 = scmp.lt.s32.totalorder %s23, 3
          %s465 = scalar_select %p464, %s23, 3
          %s466 = smul.addr %s465, 8
          %s467 = scalar_lea.vmem %s1, %s466
        $region72: #{tpu_custom_call.1} parent=63 // pred_fallthru
          _
        // Predicated region
        $region73: #{tpu_custom_call.1} parent=63 // pred_check
          %p468 = pneg %p95
        $region74: #{tpu_custom_call.1} parent=63 // pred_check_branch
          %470 = sbr.rel (%p468) target = $region76
        $region75: #{tpu_custom_call.1} parent=63 // pred_region
          %p471 = scmp.lt.s32.totalorder %s23, 3
          %s472 = scalar_select %p471, %s23, 3
          %s473 = smul.addr %s472, 8
          %s474 = scalar_lea.vmem %s2, %s473
        $region76: #{tpu_custom_call.1} parent=63 // pred_fallthru
          _
      $region64: #{tpu_custom_call.1} parent=5 // pred_fallthru
        _
      %p475 = scmp.le.s32.totalorder 1, %s23
      %p476 = scmp.lt.s32.totalorder %s23, 5
      %p477 = pnand %p475, %p476
      %p478 = pneg %p477
      // Predicated region
      $region77: #{tpu_custom_call.1} parent=5 // pred_check
        _
      $region78: #{tpu_custom_call.1} parent=5 // pred_check_branch
        %480 = sbr.rel (%p477) target = $region80
      $region79: #{tpu_custom_call.1} parent=5 // pred_region
        %s481 = ssub.s32 %s23, 1
        // Predicated region
        $region81: #{tpu_custom_call.1} parent=79 // pred_check
          %p482 = pneg %p248
        $region82: #{tpu_custom_call.1} parent=79 // pred_check_branch
          %484 = sbr.rel (%p482) target = $region84
        $region83: #{tpu_custom_call.1} parent=79 // pred_region
          %485 = dma.done [#allocation4], 16384
        $region84: #{tpu_custom_call.1} parent=79 // pred_fallthru
          _
        // Predicated region
        $region85: #{tpu_custom_call.1} parent=79 // pred_check
          %p486 = pneg %p290
        $region86: #{tpu_custom_call.1} parent=79 // pred_check_branch
          %488 = sbr.rel (%p486) target = $region88
        $region87: #{tpu_custom_call.1} parent=79 // pred_region
          %489 = dma.done [#allocation6], 16384
        $region88: #{tpu_custom_call.1} parent=79 // pred_fallthru
          _
        %p490 = scmp.lt.s32.totalorder %s28, 3
        %s491 = scalar_select %p490, %s28, 3
        %s492 = smul.addr %s491, 8
        %s493 = scalar_lea.vmem %s0, %s492
        %p494 = pneg %p49
        %p495 = pneg %p46
        %p496 = scmp.lt.s32.totalorder %s28, 3
        %s497 = scalar_select %p496, %s28, 3
        %s498 = smul.addr %s497, 8
        %s499 = scalar_lea.vmem %s1, %s498
        %p500 = pneg %p75
        %p501 = pneg %p72
        %p502 = scmp.lt.s32.totalorder %s28, 3
        %s503 = scalar_select %p502, %s28, 3
        %s504 = smul.addr %s503, 8
        %s505 = scalar_lea.vmem %s2, %s504
        %p506 = pneg %p101
        %p507 = pneg %p98
        %p508 = pneg %p122
        %p509 = pneg %p119
        %p510 = pneg %p143
        %p511 = pneg %p140
        %p512 = pneg %p164
        %p513 = pneg %p161
        %p514 = pneg %p185
        %p515 = pneg %p182
        %p516 = pneg %p206
        %p517 = pneg %p203
        %p518 = pneg %p227
        %p519 = pneg %p224
        %p520 = pneg %p248
        %p521 = pneg %p245
        %p522 = pneg %p269
        %p523 = pneg %p266
        %p524 = pneg %p290
        %p525 = pneg %p287
        %p526 = pneg %p311
        %p527 = pneg %p308
        %p528 = pneg %p332
        %p529 = pneg %p329
        %p530 = pneg %p353
        %p531 = pneg %p350
        %p532 = pneg %p379
        %p533 = pneg %p376
        %p534 = scmp.lt.s32.totalorder %s28, 3
        %s535 = scalar_select %p534, %s28, 3
        %s536 = smul.addr %s535, 8
        %s537 = scalar_lea.vmem %s15, %s536
        %p538 = scmp.lt.s32.totalorder %s28, 3
        %s539 = scalar_select %p538, %s28, 3
        %s540 = smul.addr %s539, 8
        %s541 = scalar_lea.vmem %s0, %s540
        %p542 = scmp.lt.s32.totalorder %s28, 3
        %s543 = scalar_select %p542, %s28, 3
        %s544 = smul.addr %s543, 8
        %s545 = scalar_lea.vmem %s1, %s544
        %p546 = scmp.lt.s32.totalorder %s28, 3
        %s547 = scalar_select %p546, %s28, 3
        %s548 = smul.addr %s547, 8
        %s549 = scalar_lea.vmem %s2, %s548
        %p550 = scmp.lt.s32.totalorder %s28, 3
        %s551 = scalar_select %p550, %s28, 3
        %s552 = smul.addr %s551, 8
        %s553 = scalar_lea.vmem %s15, %s552
        %v554 = vld [vmem:[%s545] sm:$0xff]
        %v555 = vld [vmem:[%s3] sm:$0x1]
        %557 = vset.pattern.permute.xlu0 0
        %558 = vperm.xlu0 %557, %v554
        %v559 = vpop.permute.xlu0 %558
        %v562 = vlaneseq
        %v563 = vshrl.u32 %v562, 7
        %v564 = vsub.s32 0, %v563
        %v565 = vrot.slane %v555, %v564
        %v567 = vmul.f32 %v559, %v565
        %v568 = vld [vmem:[%s4] sm:$0x1]
        %v570 = vlaneseq
        %v571 = vshrl.u32 %v570, 7
        %v572 = vsub.s32 0, %v571
        %v573 = vrot.slane %v568, %v572
        %v575 = vadd.f32 %v567, %v573
        %v576 = vmax.f32 %v575, 0.0
        %v577 = vld [vmem:[%s5] sm:$0xff]
        %v578 = vld [vmem:[%s5 + $0x8] sm:$0xff]
        %v579 = vld [vmem:[%s5 + $0x10] sm:$0xff]
        %v580 = vld [vmem:[%s5 + $0x18] sm:$0xff]
        %v581 = vld [vmem:[%s6] sm:$0x1]
        %v583 = vlaneseq
        %v584 = vshrl.u32 %v583, 7
        %v585 = vsub.s32 0, %v584
        %v586 = vrot.slane %v581, %v585
        %vm588 = vcmask 261120
        %v590 = vsel %vm588, %v576, 0
        %592 = vmatprep.subr.mxu0 0.0
        %593 = vmatpush1.msra.mxu0 %v577
        %594 = vmatprep.subr.mxu0 0.0
        %595 = vmatpush1.msra.mxu0 %v578
        %596 = vmatprep.subr.mxu0 0.0
        %597 = vmatpush1.msra.mxu0 %v579
        %598 = vmatprep.subr.mxu0 0.0
        %599 = vmatpush1.msra.mxu0 %v580
        %600 = vmatprep.subr.mxu0 0.0
        %601 = vmatpush1.msra.mxu0 0.0
        %602 = vmatprep.subr.mxu0 0.0
        %603 = vmatpush1.msra.mxu0 0.0
        %604 = vmatprep.subr.mxu0 0.0
        %605 = vmatpush1.msra.mxu0 0.0
        %606 = vmatprep.subr.mxu0 0.0
        %607 = vmatpush1.msra.mxu0 0.0
        %608 = vmatprep.subr.mxu0 0.0
        %609 = vmatpush1.msra.mxu0 0.0
        %610 = vmatprep.subr.mxu0 0.0
        %611 = vmatpush1.msra.mxu0 0.0
        %612 = vmatprep.subr.mxu0 0.0
        %613 = vmatpush1.msra.mxu0 0.0
        %614 = vmatprep.subr.mxu0 0.0
        %615 = vmatpush1.msra.mxu0 0.0
        %616 = vmatprep.subr.mxu0 0.0
        %617 = vmatpush1.msra.mxu0 0.0
        %618 = vmatprep.subr.mxu0 0.0
        %619 = vmatpush1.msra.mxu0 0.0
        %620 = vmatprep.subr.mxu0 0.0
        %621 = vmatpush1.msra.mxu0 0.0
        %622 = vmatprep.subr.mxu0 0.0
        %623 = vmatpush1.msra.mxu0 0.0
        %624 = vmatprep.subr.mxu0 0.0
        %625 = vmatpush1.msra.mxu0 0.0
        %626 = vmatprep.subr.mxu0 0.0
        %627 = vmatpush1.msra.mxu0 0.0
        %628 = vmatprep.subr.mxu0 0.0
        %629 = vmatpush1.msra.mxu0 0.0
        %630 = vmatprep.subr.mxu0 0.0
        %631 = vmatpush1.msra.mxu0 0.0
        %632 = vmatprep.subr.mxu0 0.0
        %633 = vmatpush1.msra.mxu0 0.0
        %634 = vmatprep.subr.mxu0 0.0
        %635 = vmatpush1.msra.mxu0 0.0
        %636 = vmatprep.subr.mxu0 0.0
        %637 = vmatpush1.msra.mxu0 0.0
        %638 = vmatprep.subr.mxu0 0.0
        %639 = vmatpush1.msra.mxu0 0.0
        %640 = vmatprep.subr.mxu0 0.0
        %641 = vmatpush1.msra.mxu0 0.0
        %642 = vmatprep.subr.mxu0 0.0
        %643 = vmatpush1.msra.mxu0 0.0
        %644 = vmatprep.subr.mxu0 0.0
        %645 = vmatpush1.msra.mxu0 0.0
        %646 = vmatprep.subr.mxu0 0.0
        %647 = vmatpush1.msra.mxu0 0.0
        %648 = vmatprep.subr.mxu0 0.0
        %649 = vmatpush1.msra.mxu0 0.0
        %650 = vmatprep.subr.mxu0 0.0
        %651 = vmatpush1.msra.mxu0 0.0
        %652 = vmatprep.subr.mxu0 0.0
        %653 = vmatpush1.msra.mxu0 0.0
        %654 = vmatprep.subr.mxu0 0.0
        %655 = vmatpush1.msra.mxu0 0.0
        %656 = vmatprep.mubr.f32.mxu0 0.0
        %657 = vmatmul.mubr.f32.gmra.mrb[0].mxu0 %v590
        %v658 = vpop.f32.mrb[0].mxu0
        %v659 = vadd.f32 %v586, %v658
        %v660 = vpop.f32.mrb[0].mxu0
        %661 = vdwg.mxu0
        %v662 = vlaneseq
        %v663 = vand.u32 %v662, 127
        %v664 = vld [vmem:[%s549] sm:$0xff]
        %v665 = vadd.s32 %v664, 42
        %666 = vset.pattern.permute.xlu0 0
        %667 = vperm.xlu0 %666, %v665
        %v668 = vpop.permute.xlu0 %667
        %vm669 = vcmp.eq.s32.totalorder %v663, %v668
        %v670 = vsel %vm669, 1, 0
        %v671 = vcvt.s32.f32 %v670
        %672 = vst [vmem:[#allocation2] sm:$0xff] %v671
        %673 = vst.msk [vmem:[#allocation2] sm:$0xff] %vm588, %v659
        %v674 = vld [vmem:[%s541] sm:$0xff]
        %676 = vrot.lane.b32.xlu0 %v674, 32
        %v677 = vpop.permute.xlu0 %676
        %vm679 = vcmask 343296
        %680 = vst.msk [vmem:[#allocation2] sm:$0xff] %vm679, %v677
        %v681 = vld [vmem:[#allocation2] sm:$0xff]
        %v682 = vld [vmem:[%s7] sm:$0xff]
        %v683 = vld [vmem:[%s7 + $0x8] sm:$0xff]
        %v684 = vld [vmem:[%s7 + $0x10] sm:$0xff]
        %v685 = vld [vmem:[%s7 + $0x18] sm:$0xff]
        %v686 = vld [vmem:[%s7 + $0x20] sm:$0xff]
        %v687 = vld [vmem:[%s7 + $0x28] sm:$0xff]
        %v688 = vld [vmem:[%s7 + $0x30] sm:$0xff]
        %v689 = vld [vmem:[%s7 + $0x38] sm:$0xff]
        %v690 = vld [vmem:[%s7 + $0x40] sm:$0xff]
        %v691 = vld [vmem:[%s7 + $0x48] sm:$0xff]
        %v692 = vld [vmem:[%s7 + $0x50] sm:$0xff]
        %v693 = vld [vmem:[%s7 + $0x58] sm:$0xff]
        %v694 = vld [vmem:[%s7 + $0x60] sm:$0xff]
        %v695 = vld [vmem:[%s7 + $0x68] sm:$0xff]
        %v696 = vld [vmem:[%s7 + $0x70] sm:$0xff]
        %v697 = vld [vmem:[%s7 + $0x78] sm:$0xff]
        %v698 = vld [vmem:[%s7 + $0x80] sm:$0xff]
        %v699 = vld [vmem:[%s7 + $0x88] sm:$0xff]
        %v700 = vld [vmem:[%s7 + $0x90] sm:$0xff]
        %v701 = vld [vmem:[%s7 + $0x98] sm:$0xff]
        %v702 = vld [vmem:[%s7 + $0xa0] sm:$0xff]
        %v703 = vld [vmem:[%s7 + $0xa8] sm:$0xff]
        %v704 = vld [vmem:[%s7 + $0xb0] sm:$0xff]
        %v705 = vld [vmem:[%s7 + $0xb8] sm:$0xff]
        %v706 = vld [vmem:[%s7 + $0xc0] sm:$0xff]
        %v707 = vld [vmem:[%s7 + $0xc8] sm:$0xff]
        %v708 = vld [vmem:[%s7 + $0xd0] sm:$0xff]
        %v709 = vld [vmem:[%s7 + $0xd8] sm:$0xff]
        %v710 = vld [vmem:[%s7 + $0xe0] sm:$0xff]
        %v711 = vld [vmem:[%s7 + $0xe8] sm:$0xff]
        %v712 = vld [vmem:[%s7 + $0xf0] sm:$0xff]
        %v713 = vld [vmem:[%s7 + $0xf8] sm:$0xff]
        %v714 = vld [vmem:[%s8] sm:$0x3]
        %v716 = vlaneseq
        %v717 = vshrl.u32 %v716, 7
        %v718 = vsub.s32 0, %v717
        %v719 = vrot.slane %v714, %v718
        %v720 = vlaneseq
        %v721 = vshrl.u32 %v720, 7
        %v722 = vsub.s32 1, %v721
        %v723 = vrot.slane %v714, %v722
        %726 = vmatprep.subr.mxu0 %v683
        %727 = vmatpush1.msra.mxu0 %v682
        %728 = vmatprep.subr.mxu0 %v685
        %729 = vmatpush1.msra.mxu0 %v684
        %730 = vmatprep.subr.mxu0 %v687
        %731 = vmatpush1.msra.mxu0 %v686
        %732 = vmatprep.subr.mxu0 %v689
        %733 = vmatpush1.msra.mxu0 %v688
        %734 = vmatprep.subr.mxu0 %v691
        %735 = vmatpush1.msra.mxu0 %v690
        %736 = vmatprep.subr.mxu0 %v693
        %737 = vmatpush1.msra.mxu0 %v692
        %738 = vmatprep.subr.mxu0 %v695
        %739 = vmatpush1.msra.mxu0 %v694
        %740 = vmatprep.subr.mxu0 %v697
        %741 = vmatpush1.msra.mxu0 %v696
        %742 = vmatprep.subr.mxu0 %v699
        %743 = vmatpush1.msra.mxu0 %v698
        %744 = vmatprep.subr.mxu0 %v701
        %745 = vmatpush1.msra.mxu0 %v700
        %746 = vmatprep.subr.mxu0 %v703
        %747 = vmatpush1.msra.mxu0 %v702
        %748 = vmatprep.subr.mxu0 %v705
        %749 = vmatpush1.msra.mxu0 %v704
        %750 = vmatprep.subr.mxu0 %v707
        %751 = vmatpush1.msra.mxu0 %v706
        %752 = vmatprep.subr.mxu0 %v709
        %753 = vmatpush1.msra.mxu0 %v708
        %754 = vmatprep.subr.mxu0 %v711
        %755 = vmatpush1.msra.mxu0 %v710
        %756 = vmatprep.subr.mxu0 %v713
        %757 = vmatpush1.msra.mxu0 %v712
        %758 = vmatprep.subr.mxu0 0.0
        %759 = vmatpush1.msra.mxu0 0.0
        %760 = vmatprep.subr.mxu0 0.0
        %761 = vmatpush1.msra.mxu0 0.0
        %762 = vmatprep.subr.mxu0 0.0
        %763 = vmatpush1.msra.mxu0 0.0
        %764 = vmatprep.subr.mxu0 0.0
        %765 = vmatpush1.msra.mxu0 0.0
        %766 = vmatprep.subr.mxu0 0.0
        %767 = vmatpush1.msra.mxu0 0.0
        %768 = vmatprep.subr.mxu0 0.0
        %769 = vmatpush1.msra.mxu0 0.0
        %770 = vmatprep.subr.mxu0 0.0
        %771 = vmatpush1.msra.mxu0 0.0
        %772 = vmatprep.subr.mxu0 0.0
        %773 = vmatpush1.msra.mxu0 0.0
        %774 = vmatprep.subr.mxu0 0.0
        %775 = vmatpush1.msra.mxu0 0.0
        %776 = vmatprep.subr.mxu0 0.0
        %777 = vmatpush1.msra.mxu0 0.0
        %778 = vmatprep.subr.mxu0 0.0
        %779 = vmatpush1.msra.mxu0 0.0
        %780 = vmatprep.subr.mxu0 0.0
        %781 = vmatpush1.msra.mxu0 0.0
        %782 = vmatprep.subr.mxu0 0.0
        %783 = vmatpush1.msra.mxu0 0.0
        %784 = vmatprep.subr.mxu0 0.0
        %785 = vmatpush1.msra.mxu0 0.0
        %786 = vmatprep.subr.mxu0 0.0
        %787 = vmatpush1.msra.mxu0 0.0
        %788 = vmatprep.subr.mxu0 0.0
        %789 = vmatpush1.msra.mxu0 0.0
        %790 = vmatprep.mubr.f32.mxu0 0.0
        %791 = vmatmul.mubr.f32.gmra.mrb[0].mxu0 %v681
        %v792 = vpop.f32.mrb[0].mxu0
        %v793 = vadd.f32 %v719, %v792
        %v794 = vpop.f32.mrb[0].mxu0
        %v795 = vadd.f32 %v723, %v794
        %796 = vdwg.mxu0
        %v797 = vmax.f32 %v793, 0.0
        %v798 = vmax.f32 %v795, 0.0
        %v799 = vld [vmem:[#allocation3] sm:$0xff]
        %v800 = vld [vmem:[#allocation3 + $0x8] sm:$0xff]
        %v801 = vld [vmem:[#allocation3 + $0x10] sm:$0xff]
        %v802 = vld [vmem:[#allocation3 + $0x18] sm:$0xff]
        %v803 = vld [vmem:[#allocation3 + $0x20] sm:$0xff]
        %v804 = vld [vmem:[#allocation3 + $0x28] sm:$0xff]
        %v805 = vld [vmem:[#allocation3 + $0x30] sm:$0xff]
        %v806 = vld [vmem:[#allocation3 + $0x38] sm:$0xff]
        %v807 = vld [vmem:[#allocation3 + $0x40] sm:$0xff]
        %v808 = vld [vmem:[#allocation3 + $0x48] sm:$0xff]
        %v809 = vld [vmem:[#allocation3 + $0x50] sm:$0xff]
        %v810 = vld [vmem:[#allocation3 + $0x58] sm:$0xff]
        %v811 = vld [vmem:[#allocation3 + $0x60] sm:$0xff]
        %v812 = vld [vmem:[#allocation3 + $0x68] sm:$0xff]
        %v813 = vld [vmem:[#allocation3 + $0x70] sm:$0xff]
        %v814 = vld [vmem:[#allocation3 + $0x78] sm:$0xff]
        %v815 = vld [vmem:[#allocation3 + $0x80] sm:$0xff]
        %v816 = vld [vmem:[#allocation3 + $0x88] sm:$0xff]
        %v817 = vld [vmem:[#allocation3 + $0x90] sm:$0xff]
        %v818 = vld [vmem:[#allocation3 + $0x98] sm:$0xff]
        %v819 = vld [vmem:[#allocation3 + $0xa0] sm:$0xff]
        %v820 = vld [vmem:[#allocation3 + $0xa8] sm:$0xff]
        %v821 = vld [vmem:[#allocation3 + $0xb0] sm:$0xff]
        %v822 = vld [vmem:[#allocation3 + $0xb8] sm:$0xff]
        %v823 = vld [vmem:[#allocation3 + $0xc0] sm:$0xff]
        %v824 = vld [vmem:[#allocation3 + $0xc8] sm:$0xff]
        %v825 = vld [vmem:[#allocation3 + $0xd0] sm:$0xff]
        %v826 = vld [vmem:[#allocation3 + $0xd8] sm:$0xff]
        %v827 = vld [vmem:[#allocation3 + $0xe0] sm:$0xff]
        %v828 = vld [vmem:[#allocation3 + $0xe8] sm:$0xff]
        %v829 = vld [vmem:[#allocation3 + $0xf0] sm:$0xff]
        %v830 = vld [vmem:[#allocation3 + $0xf8] sm:$0xff]
        %v831 = vld [vmem:[#allocation3 + $0x100] sm:$0xff]
        %v832 = vld [vmem:[#allocation3 + $0x108] sm:$0xff]
        %v833 = vld [vmem:[#allocation3 + $0x110] sm:$0xff]
        %v834 = vld [vmem:[#allocation3 + $0x118] sm:$0xff]
        %v835 = vld [vmem:[#allocation3 + $0x120] sm:$0xff]
        %v836 = vld [vmem:[#allocation3 + $0x128] sm:$0xff]
        %v837 = vld [vmem:[#allocation3 + $0x130] sm:$0xff]
        %v838 = vld [vmem:[#allocation3 + $0x138] sm:$0xff]
        %v839 = vld [vmem:[#allocation3 + $0x140] sm:$0xff]
        %v840 = vld [vmem:[#allocation3 + $0x148] sm:$0xff]
        %v841 = vld [vmem:[#allocation3 + $0x150] sm:$0xff]
        %v842 = vld [vmem:[#allocation3 + $0x158] sm:$0xff]
        %v843 = vld [vmem:[#allocation3 + $0x160] sm:$0xff]
        %v844 = vld [vmem:[#allocation3 + $0x168] sm:$0xff]
        %v845 = vld [vmem:[#allocation3 + $0x170] sm:$0xff]
        %v846 = vld [vmem:[#allocation3 + $0x178] sm:$0xff]
        %v847 = vld [vmem:[#allocation3 + $0x180] sm:$0xff]
        %v848 = vld [vmem:[#allocation3 + $0x188] sm:$0xff]
        %v849 = vld [vmem:[#allocation3 + $0x190] sm:$0xff]
        %v850 = vld [vmem:[#allocation3 + $0x198] sm:$0xff]
        %v851 = vld [vmem:[#allocation3 + $0x1a0] sm:$0xff]
        %v852 = vld [vmem:[#allocation3 + $0x1a8] sm:$0xff]
        %v853 = vld [vmem:[#allocation3 + $0x1b0] sm:$0xff]
        %v854 = vld [vmem:[#allocation3 + $0x1b8] sm:$0xff]
        %v855 = vld [vmem:[#allocation3 + $0x1c0] sm:$0xff]
        %v856 = vld [vmem:[#allocation3 + $0x1c8] sm:$0xff]
        %v857 = vld [vmem:[#allocation3 + $0x1d0] sm:$0xff]
        %v858 = vld [vmem:[#allocation3 + $0x1d8] sm:$0xff]
        %v859 = vld [vmem:[#allocation3 + $0x1e0] sm:$0xff]
        %v860 = vld [vmem:[#allocation3 + $0x1e8] sm:$0xff]
        %v861 = vld [vmem:[#allocation3 + $0x1f0] sm:$0xff]
        %v862 = vld [vmem:[#allocation3 + $0x1f8] sm:$0xff]
        %v863 = vld [vmem:[#allocation3 + $0x200] sm:$0xff]
        %v864 = vld [vmem:[#allocation3 + $0x208] sm:$0xff]
        %v865 = vld [vmem:[#allocation3 + $0x210] sm:$0xff]
        %v866 = vld [vmem:[#allocation3 + $0x218] sm:$0xff]
        %v867 = vld [vmem:[#allocation3 + $0x220] sm:$0xff]
        %v868 = vld [vmem:[#allocation3 + $0x228] sm:$0xff]
        %v869 = vld [vmem:[#allocation3 + $0x230] sm:$0xff]
        %v870 = vld [vmem:[#allocation3 + $0x238] sm:$0xff]
        %v871 = vld [vmem:[#allocation3 + $0x240] sm:$0xff]
        %v872 = vld [vmem:[#allocation3 + $0x248] sm:$0xff]
        %v873 = vld [vmem:[#allocation3 + $0x250] sm:$0xff]
        %v874 = vld [vmem:[#allocation3 + $0x258] sm:$0xff]
        %v875 = vld [vmem:[#allocation3 + $0x260] sm:$0xff]
        %v876 = vld [vmem:[#allocation3 + $0x268] sm:$0xff]
        %v877 = vld [vmem:[#allocation3 + $0x270] sm:$0xff]
        %v878 = vld [vmem:[#allocation3 + $0x278] sm:$0xff]
        %v879 = vld [vmem:[#allocation3 + $0x280] sm:$0xff]
        %v880 = vld [vmem:[#allocation3 + $0x288] sm:$0xff]
        %v881 = vld [vmem:[#allocation3 + $0x290] sm:$0xff]
        %v882 = vld [vmem:[#allocation3 + $0x298] sm:$0xff]
        %v883 = vld [vmem:[#allocation3 + $0x2a0] sm:$0xff]
        %v884 = vld [vmem:[#allocation3 + $0x2a8] sm:$0xff]
        %v885 = vld [vmem:[#allocation3 + $0x2b0] sm:$0xff]
        %v886 = vld [vmem:[#allocation3 + $0x2b8] sm:$0xff]
        %v887 = vld [vmem:[#allocation3 + $0x2c0] sm:$0xff]
        %v888 = vld [vmem:[#allocation3 + $0x2c8] sm:$0xff]
        %v889 = vld [vmem:[#allocation3 + $0x2d0] sm:$0xff]
        %v890 = vld [vmem:[#allocation3 + $0x2d8] sm:$0xff]
        %v891 = vld [vmem:[#allocation3 + $0x2e0] sm:$0xff]
        %v892 = vld [vmem:[#allocation3 + $0x2e8] sm:$0xff]
        %v893 = vld [vmem:[#allocation3 + $0x2f0] sm:$0xff]
        %v894 = vld [vmem:[#allocation3 + $0x2f8] sm:$0xff]
        %v895 = vld [vmem:[#allocation3 + $0x300] sm:$0xff]
        %v896 = vld [vmem:[#allocation3 + $0x308] sm:$0xff]
        %v897 = vld [vmem:[#allocation3 + $0x310] sm:$0xff]
        %v898 = vld [vmem:[#allocation3 + $0x318] sm:$0xff]
        %v899 = vld [vmem:[#allocation3 + $0x320] sm:$0xff]
        %v900 = vld [vmem:[#allocation3 + $0x328] sm:$0xff]
        %v901 = vld [vmem:[#allocation3 + $0x330] sm:$0xff]
        %v902 = vld [vmem:[#allocation3 + $0x338] sm:$0xff]
        %v903 = vld [vmem:[#allocation3 + $0x340] sm:$0xff]
        %v904 = vld [vmem:[#allocation3 + $0x348] sm:$0xff]
        %v905 = vld [vmem:[#allocation3 + $0x350] sm:$0xff]
        %v906 = vld [vmem:[#allocation3 + $0x358] sm:$0xff]
        %v907 = vld [vmem:[#allocation3 + $0x360] sm:$0xff]
        %v908 = vld [vmem:[#allocation3 + $0x368] sm:$0xff]
        %v909 = vld [vmem:[#allocation3 + $0x370] sm:$0xff]
        %v910 = vld [vmem:[#allocation3 + $0x378] sm:$0xff]
        %v911 = vld [vmem:[#allocation3 + $0x380] sm:$0xff]
        %v912 = vld [vmem:[#allocation3 + $0x388] sm:$0xff]
        %v913 = vld [vmem:[#allocation3 + $0x390] sm:$0xff]
        %v914 = vld [vmem:[#allocation3 + $0x398] sm:$0xff]
        %v915 = vld [vmem:[#allocation3 + $0x3a0] sm:$0xff]
        %v916 = vld [vmem:[#allocation3 + $0x3a8] sm:$0xff]
        %v917 = vld [vmem:[#allocation3 + $0x3b0] sm:$0xff]
        %v918 = vld [vmem:[#allocation3 + $0x3b8] sm:$0xff]
        %v919 = vld [vmem:[#allocation3 + $0x3c0] sm:$0xff]
        %v920 = vld [vmem:[#allocation3 + $0x3c8] sm:$0xff]
        %v921 = vld [vmem:[#allocation3 + $0x3d0] sm:$0xff]
        %v922 = vld [vmem:[#allocation3 + $0x3d8] sm:$0xff]
        %v923 = vld [vmem:[#allocation3 + $0x3e0] sm:$0xff]
        %v924 = vld [vmem:[#allocation3 + $0x3e8] sm:$0xff]
        %v925 = vld [vmem:[#allocation3 + $0x3f0] sm:$0xff]
        %v926 = vld [vmem:[#allocation3 + $0x3f8] sm:$0xff]
        %v927 = vld [vmem:[%s10] sm:$0xf]
        %v929 = vlaneseq
        %v930 = vshrl.u32 %v929, 7
        %v931 = vsub.s32 0, %v930
        %v932 = vrot.slane %v927, %v931
        %v933 = vlaneseq
        %v934 = vshrl.u32 %v933, 7
        %v935 = vsub.s32 1, %v934
        %v936 = vrot.slane %v927, %v935
        %v937 = vlaneseq
        %v938 = vshrl.u32 %v937, 7
        %v939 = vsub.s32 2, %v938
        %v940 = vrot.slane %v927, %v939
        %v941 = vlaneseq
        %v942 = vshrl.u32 %v941, 7
        %v943 = vsub.s32 3, %v942
        %v944 = vrot.slane %v927, %v943
        %949 = vmatprep.subr.mxu0 %v800
        %950 = vmatpush1.msra.mxu0 %v799
        %951 = vmatprep.subr.mxu0 %v804
        %952 = vmatpush1.msra.mxu0 %v803
        %953 = vmatprep.subr.mxu0 %v808
        %954 = vmatpush1.msra.mxu0 %v807
        %955 = vmatprep.subr.mxu0 %v812
        %956 = vmatpush1.msra.mxu0 %v811
        %957 = vmatprep.subr.mxu0 %v816
        %958 = vmatpush1.msra.mxu0 %v815
        %959 = vmatprep.subr.mxu0 %v820
        %960 = vmatpush1.msra.mxu0 %v819
        %961 = vmatprep.subr.mxu0 %v824
        %962 = vmatpush1.msra.mxu0 %v823
        %963 = vmatprep.subr.mxu0 %v828
        %964 = vmatpush1.msra.mxu0 %v827
        %965 = vmatprep.subr.mxu0 %v832
        %966 = vmatpush1.msra.mxu0 %v831
        %967 = vmatprep.subr.mxu0 %v836
        %968 = vmatpush1.msra.mxu0 %v835
        %969 = vmatprep.subr.mxu0 %v840
        %970 = vmatpush1.msra.mxu0 %v839
        %971 = vmatprep.subr.mxu0 %v844
        %972 = vmatpush1.msra.mxu0 %v843
        %973 = vmatprep.subr.mxu0 %v848
        %974 = vmatpush1.msra.mxu0 %v847
        %975 = vmatprep.subr.mxu0 %v852
        %976 = vmatpush1.msra.mxu0 %v851
        %977 = vmatprep.subr.mxu0 %v856
        %978 = vmatpush1.msra.mxu0 %v855
        %979 = vmatprep.subr.mxu0 %v860
        %980 = vmatpush1.msra.mxu0 %v859
        %981 = vmatprep.subr.mxu0 %v864
        %982 = vmatpush1.msra.mxu0 %v863
        %983 = vmatprep.subr.mxu0 %v868
        %984 = vmatpush1.msra.mxu0 %v867
        %985 = vmatprep.subr.mxu0 %v872
        %986 = vmatpush1.msra.mxu0 %v871
        %987 = vmatprep.subr.mxu0 %v876
        %988 = vmatpush1.msra.mxu0 %v875
        %989 = vmatprep.subr.mxu0 %v880
        %990 = vmatpush1.msra.mxu0 %v879
        %991 = vmatprep.subr.mxu0 %v884
        %992 = vmatpush1.msra.mxu0 %v883
        %993 = vmatprep.subr.mxu0 %v888
        %994 = vmatpush1.msra.mxu0 %v887
        %995 = vmatprep.subr.mxu0 %v892
        %996 = vmatpush1.msra.mxu0 %v891
        %997 = vmatprep.subr.mxu0 %v896
        %998 = vmatpush1.msra.mxu0 %v895
        %999 = vmatprep.subr.mxu0 %v900
        %1000 = vmatpush1.msra.mxu0 %v899
        %1001 = vmatprep.subr.mxu0 %v904
        %1002 = vmatpush1.msra.mxu0 %v903
        %1003 = vmatprep.subr.mxu0 %v908
        %1004 = vmatpush1.msra.mxu0 %v907
        %1005 = vmatprep.subr.mxu0 %v912
        %1006 = vmatpush1.msra.mxu0 %v911
        %1007 = vmatprep.subr.mxu0 %v916
        %1008 = vmatpush1.msra.mxu0 %v915
        %1009 = vmatprep.subr.mxu0 %v920
        %1010 = vmatpush1.msra.mxu0 %v919
        %1011 = vmatprep.subr.mxu0 %v924
        %1012 = vmatpush1.msra.mxu0 %v923
        %1013 = vmatprep.mubr.f32.mxu0 %v798
        %1014 = vmatmul.mubr.f32.gmra.mrb[0].mxu0 %v797
        %v1015 = vpop.f32.mrb[0].mxu0
        %v1016 = vadd.f32 %v932, %v1015
        %v1017 = vpop.f32.mrb[0].mxu0
        %v1018 = vadd.f32 %v936, %v1017
        %1019 = vdwg.mxu0
        %1020 = vmatprep.subr.mxu0 %v802
        %1021 = vmatpush1.msra.mxu0 %v801
        %1022 = vmatprep.subr.mxu0 %v806
        %1023 = vmatpush1.msra.mxu0 %v805
        %1024 = vmatprep.subr.mxu0 %v810
        %1025 = vmatpush1.msra.mxu0 %v809
        %1026 = vmatprep.subr.mxu0 %v814
        %1027 = vmatpush1.msra.mxu0 %v813
        %1028 = vmatprep.subr.mxu0 %v818
        %1029 = vmatpush1.msra.mxu0 %v817
        %1030 = vmatprep.subr.mxu0 %v822
        %1031 = vmatpush1.msra.mxu0 %v821
        %1032 = vmatprep.subr.mxu0 %v826
        %1033 = vmatpush1.msra.mxu0 %v825
        %1034 = vmatprep.subr.mxu0 %v830
        %1035 = vmatpush1.msra.mxu0 %v829
        %1036 = vmatprep.subr.mxu0 %v834
        %1037 = vmatpush1.msra.mxu0 %v833
        %1038 = vmatprep.subr.mxu0 %v838
        %1039 = vmatpush1.msra.mxu0 %v837
        %1040 = vmatprep.subr.mxu0 %v842
        %1041 = vmatpush1.msra.mxu0 %v841
        %1042 = vmatprep.subr.mxu0 %v846
        %1043 = vmatpush1.msra.mxu0 %v845
        %1044 = vmatprep.subr.mxu0 %v850
        %1045 = vmatpush1.msra.mxu0 %v849
        %1046 = vmatprep.subr.mxu0 %v854
        %1047 = vmatpush1.msra.mxu0 %v853
        %1048 = vmatprep.subr.mxu0 %v858
        %1049 = vmatpush1.msra.mxu0 %v857
        %1050 = vmatprep.subr.mxu0 %v862
        %1051 = vmatpush1.msra.mxu0 %v861
        %1052 = vmatprep.subr.mxu0 %v866
        %1053 = vmatpush1.msra.mxu0 %v865
        %1054 = vmatprep.subr.mxu0 %v870
        %1055 = vmatpush1.msra.mxu0 %v869
        %1056 = vmatprep.subr.mxu0 %v874
        %1057 = vmatpush1.msra.mxu0 %v873
        %1058 = vmatprep.subr.mxu0 %v878
        %1059 = vmatpush1.msra.mxu0 %v877
        %1060 = vmatprep.subr.mxu0 %v882
        %1061 = vmatpush1.msra.mxu0 %v881
        %1062 = vmatprep.subr.mxu0 %v886
        %1063 = vmatpush1.msra.mxu0 %v885
        %1064 = vmatprep.subr.mxu0 %v890
        %1065 = vmatpush1.msra.mxu0 %v889
        %1066 = vmatprep.subr.mxu0 %v894
        %1067 = vmatpush1.msra.mxu0 %v893
        %1068 = vmatprep.subr.mxu0 %v898
        %1069 = vmatpush1.msra.mxu0 %v897
        %1070 = vmatprep.subr.mxu0 %v902
        %1071 = vmatpush1.msra.mxu0 %v901
        %1072 = vmatprep.subr.mxu0 %v906
        %1073 = vmatpush1.msra.mxu0 %v905
        %1074 = vmatprep.subr.mxu0 %v910
        %1075 = vmatpush1.msra.mxu0 %v909
        %1076 = vmatprep.subr.mxu0 %v914
        %1077 = vmatpush1.msra.mxu0 %v913
        %1078 = vmatprep.subr.mxu0 %v918
        %1079 = vmatpush1.msra.mxu0 %v917
        %1080 = vmatprep.subr.mxu0 %v922
        %1081 = vmatpush1.msra.mxu0 %v921
        %1082 = vmatprep.subr.mxu0 %v926
        %1083 = vmatpush1.msra.mxu0 %v925
        %1084 = vmatprep.mubr.f32.mxu0 %v798
        %1085 = vmatmul.mubr.f32.gmra.mrb[0].mxu0 %v797
        %v1086 = vpop.f32.mrb[0].mxu0
        %v1087 = vadd.f32 %v940, %v1086
        %v1088 = vpop.f32.mrb[0].mxu0
        %v1089 = vadd.f32 %v944, %v1088
        %1090 = vdwg.mxu0
        %v1091 = vmax.f32 %v1016, 0.0
        %v1092 = vmax.f32 %v1018, 0.0
        %v1093 = vmax.f32 %v1087, 0.0
        %v1094 = vmax.f32 %v1089, 0.0
        %v1095 = vld [vmem:[#allocation5] sm:$0xff]
        %v1096 = vld [vmem:[#allocation5 + $0x8] sm:$0xff]
        %v1097 = vld [vmem:[#allocation5 + $0x10] sm:$0xff]
        %v1098 = vld [vmem:[#allocation5 + $0x18] sm:$0xff]
        %v1099 = vld [vmem:[#allocation5 + $0x20] sm:$0xff]
        %v1100 = vld [vmem:[#allocation5 + $0x28] sm:$0xff]
        %v1101 = vld [vmem:[#allocation5 + $0x30] sm:$0xff]
        %v1102 = vld [vmem:[#allocation5 + $0x38] sm:$0xff]
        %v1103 = vld [vmem:[#allocation5 + $0x40] sm:$0xff]
        %v1104 = vld [vmem:[#allocation5 + $0x48] sm:$0xff]
        %v1105 = vld [vmem:[#allocation5 + $0x50] sm:$0xff]
        %v1106 = vld [vmem:[#allocation5 + $0x58] sm:$0xff]
        %v1107 = vld [vmem:[#allocation5 + $0x60] sm:$0xff]
        %v1108 = vld [vmem:[#allocation5 + $0x68] sm:$0xff]
        %v1109 = vld [vmem:[#allocation5 + $0x70] sm:$0xff]
        %v1110 = vld [vmem:[#allocation5 + $0x78] sm:$0xff]
        %v1111 = vld [vmem:[#allocation5 + $0x80] sm:$0xff]
        %v1112 = vld [vmem:[#allocation5 + $0x88] sm:$0xff]
        %v1113 = vld [vmem:[#allocation5 + $0x90] sm:$0xff]
        %v1114 = vld [vmem:[#allocation5 + $0x98] sm:$0xff]
        %v1115 = vld [vmem:[#allocation5 + $0xa0] sm:$0xff]
        %v1116 = vld [vmem:[#allocation5 + $0xa8] sm:$0xff]
        %v1117 = vld [vmem:[#allocation5 + $0xb0] sm:$0xff]
        %v1118 = vld [vmem:[#allocation5 + $0xb8] sm:$0xff]
        %v1119 = vld [vmem:[#allocation5 + $0xc0] sm:$0xff]
        %v1120 = vld [vmem:[#allocation5 + $0xc8] sm:$0xff]
        %v1121 = vld [vmem:[#allocation5 + $0xd0] sm:$0xff]
        %v1122 = vld [vmem:[#allocation5 + $0xd8] sm:$0xff]
        %v1123 = vld [vmem:[#allocation5 + $0xe0] sm:$0xff]
        %v1124 = vld [vmem:[#allocation5 + $0xe8] sm:$0xff]
        %v1125 = vld [vmem:[#allocation5 + $0xf0] sm:$0xff]
        %v1126 = vld [vmem:[#allocation5 + $0xf8] sm:$0xff]
        %v1127 = vld [vmem:[#allocation5 + $0x100] sm:$0xff]
        %v1128 = vld [vmem:[#allocation5 + $0x108] sm:$0xff]
        %v1129 = vld [vmem:[#allocation5 + $0x110] sm:$0xff]
        %v1130 = vld [vmem:[#allocation5 + $0x118] sm:$0xff]
        %v1131 = vld [vmem:[#allocation5 + $0x120] sm:$0xff]
        %v1132 = vld [vmem:[#allocation5 + $0x128] sm:$0xff]
        %v1133 = vld [vmem:[#allocation5 + $0x130] sm:$0xff]
        %v1134 = vld [vmem:[#allocation5 + $0x138] sm:$0xff]
        %v1135 = vld [vmem:[#allocation5 + $0x140] sm:$0xff]
        %v1136 = vld [vmem:[#allocation5 + $0x148] sm:$0xff]
        %v1137 = vld [vmem:[#allocation5 + $0x150] sm:$0xff]
        %v1138 = vld [vmem:[#allocation5 + $0x158] sm:$0xff]
        %v1139 = vld [vmem:[#allocation5 + $0x160] sm:$0xff]
        %v1140 = vld [vmem:[#allocation5 + $0x168] sm:$0xff]
        %v1141 = vld [vmem:[#allocation5 + $0x170] sm:$0xff]
        %v1142 = vld [vmem:[#allocation5 + $0x178] sm:$0xff]
        %v1143 = vld [vmem:[#allocation5 + $0x180] sm:$0xff]
        %v1144 = vld [vmem:[#allocation5 + $0x188] sm:$0xff]
        %v1145 = vld [vmem:[#allocation5 + $0x190] sm:$0xff]
        %v1146 = vld [vmem:[#allocation5 + $0x198] sm:$0xff]
        %v1147 = vld [vmem:[#allocation5 + $0x1a0] sm:$0xff]
        %v1148 = vld [vmem:[#allocation5 + $0x1a8] sm:$0xff]
        %v1149 = vld [vmem:[#allocation5 + $0x1b0] sm:$0xff]
        %v1150 = vld [vmem:[#allocation5 + $0x1b8] sm:$0xff]
        %v1151 = vld [vmem:[#allocation5 + $0x1c0] sm:$0xff]
        %v1152 = vld [vmem:[#allocation5 + $0x1c8] sm:$0xff]
        %v1153 = vld [vmem:[#allocation5 + $0x1d0] sm:$0xff]
        %v1154 = vld [vmem:[#allocation5 + $0x1d8] sm:$0xff]
        %v1155 = vld [vmem:[#allocation5 + $0x1e0] sm:$0xff]
        %v1156 = vld [vmem:[#allocation5 + $0x1e8] sm:$0xff]
        %v1157 = vld [vmem:[#allocation5 + $0x1f0] sm:$0xff]
        %v1158 = vld [vmem:[#allocation5 + $0x1f8] sm:$0xff]
        %v1159 = vld [vmem:[#allocation5 + $0x200] sm:$0xff]
        %v1160 = vld [vmem:[#allocation5 + $0x208] sm:$0xff]
        %v1161 = vld [vmem:[#allocation5 + $0x210] sm:$0xff]
        %v1162 = vld [vmem:[#allocation5 + $0x218] sm:$0xff]
        %v1163 = vld [vmem:[#allocation5 + $0x220] sm:$0xff]
        %v1164 = vld [vmem:[#allocation5 + $0x228] sm:$0xff]
        %v1165 = vld [vmem:[#allocation5 + $0x230] sm:$0xff]
        %v1166 = vld [vmem:[#allocation5 + $0x238] sm:$0xff]
        %v1167 = vld [vmem:[#allocation5 + $0x240] sm:$0xff]
        %v1168 = vld [vmem:[#allocation5 + $0x248] sm:$0xff]
        %v1169 = vld [vmem:[#allocation5 + $0x250] sm:$0xff]
        %v1170 = vld [vmem:[#allocation5 + $0x258] sm:$0xff]
        %v1171 = vld [vmem:[#allocation5 + $0x260] sm:$0xff]
        %v1172 = vld [vmem:[#allocation5 + $0x268] sm:$0xff]
        %v1173 = vld [vmem:[#allocation5 + $0x270] sm:$0xff]
        %v1174 = vld [vmem:[#allocation5 + $0x278] sm:$0xff]
        %v1175 = vld [vmem:[#allocation5 + $0x280] sm:$0xff]
        %v1176 = vld [vmem:[#allocation5 + $0x288] sm:$0xff]
        %v1177 = vld [vmem:[#allocation5 + $0x290] sm:$0xff]
        %v1178 = vld [vmem:[#allocation5 + $0x298] sm:$0xff]
        %v1179 = vld [vmem:[#allocation5 + $0x2a0] sm:$0xff]
        %v1180 = vld [vmem:[#allocation5 + $0x2a8] sm:$0xff]
        %v1181 = vld [vmem:[#allocation5 + $0x2b0] sm:$0xff]
        %v1182 = vld [vmem:[#allocation5 + $0x2b8] sm:$0xff]
        %v1183 = vld [vmem:[#allocation5 + $0x2c0] sm:$0xff]
        %v1184 = vld [vmem:[#allocation5 + $0x2c8] sm:$0xff]
        %v1185 = vld [vmem:[#allocation5 + $0x2d0] sm:$0xff]
        %v1186 = vld [vmem:[#allocation5 + $0x2d8] sm:$0xff]
        %v1187 = vld [vmem:[#allocation5 + $0x2e0] sm:$0xff]
        %v1188 = vld [vmem:[#allocation5 + $0x2e8] sm:$0xff]
        %v1189 = vld [vmem:[#allocation5 + $0x2f0] sm:$0xff]
        %v1190 = vld [vmem:[#allocation5 + $0x2f8] sm:$0xff]
        %v1191 = vld [vmem:[#allocation5 + $0x300] sm:$0xff]
        %v1192 = vld [vmem:[#allocation5 + $0x308] sm:$0xff]
        %v1193 = vld [vmem:[#allocation5 + $0x310] sm:$0xff]
        %v1194 = vld [vmem:[#allocation5 + $0x318] sm:$0xff]
        %v1195 = vld [vmem:[#allocation5 + $0x320] sm:$0xff]
        %v1196 = vld [vmem:[#allocation5 + $0x328] sm:$0xff]
        %v1197 = vld [vmem:[#allocation5 + $0x330] sm:$0xff]
        %v1198 = vld [vmem:[#allocation5 + $0x338] sm:$0xff]
        %v1199 = vld [vmem:[#allocation5 + $0x340] sm:$0xff]
        %v1200 = vld [vmem:[#allocation5 + $0x348] sm:$0xff]
        %v1201 = vld [vmem:[#allocation5 + $0x350] sm:$0xff]
        %v1202 = vld [vmem:[#allocation5 + $0x358] sm:$0xff]
        %v1203 = vld [vmem:[#allocation5 + $0x360] sm:$0xff]
        %v1204 = vld [vmem:[#allocation5 + $0x368] sm:$0xff]
        %v1205 = vld [vmem:[#allocation5 + $0x370] sm:$0xff]
        %v1206 = vld [vmem:[#allocation5 + $0x378] sm:$0xff]
        %v1207 = vld [vmem:[#allocation5 + $0x380] sm:$0xff]
        %v1208 = vld [vmem:[#allocation5 + $0x388] sm:$0xff]
        %v1209 = vld [vmem:[#allocation5 + $0x390] sm:$0xff]
        %v1210 = vld [vmem:[#allocation5 + $0x398] sm:$0xff]
        %v1211 = vld [vmem:[#allocation5 + $0x3a0] sm:$0xff]
        %v1212 = vld [vmem:[#allocation5 + $0x3a8] sm:$0xff]
        %v1213 = vld [vmem:[#allocation5 + $0x3b0] sm:$0xff]
        %v1214 = vld [vmem:[#allocation5 + $0x3b8] sm:$0xff]
        %v1215 = vld [vmem:[#allocation5 + $0x3c0] sm:$0xff]
        %v1216 = vld [vmem:[#allocation5 + $0x3c8] sm:$0xff]
        %v1217 = vld [vmem:[#allocation5 + $0x3d0] sm:$0xff]
        %v1218 = vld [vmem:[#allocation5 + $0x3d8] sm:$0xff]
        %v1219 = vld [vmem:[#allocation5 + $0x3e0] sm:$0xff]
        %v1220 = vld [vmem:[#allocation5 + $0x3e8] sm:$0xff]
        %v1221 = vld [vmem:[#allocation5 + $0x3f0] sm:$0xff]
        %v1222 = vld [vmem:[#allocation5 + $0x3f8] sm:$0xff]
        %v1223 = vld [vmem:[%s12] sm:$0x3]
        %v1225 = vlaneseq
        %v1226 = vshrl.u32 %v1225, 7
        %v1227 = vsub.s32 0, %v1226
        %v1228 = vrot.slane %v1223, %v1227
        %v1229 = vlaneseq
        %v1230 = vshrl.u32 %v1229, 7
        %v1231 = vsub.s32 1, %v1230
        %v1232 = vrot.slane %v1223, %v1231
        %1235 = vmatprep.subr.mxu0 %v1096
        %1236 = vmatpush1.msra.mxu0 %v1095
        %1237 = vmatprep.subr.mxu0 %v1098
        %1238 = vmatpush1.msra.mxu0 %v1097
        %1239 = vmatprep.subr.mxu0 %v1100
        %1240 = vmatpush1.msra.mxu0 %v1099
        %1241 = vmatprep.subr.mxu0 %v1102
        %1242 = vmatpush1.msra.mxu0 %v1101
        %1243 = vmatprep.subr.mxu0 %v1104
        %1244 = vmatpush1.msra.mxu0 %v1103
        %1245 = vmatprep.subr.mxu0 %v1106
        %1246 = vmatpush1.msra.mxu0 %v1105
        %1247 = vmatprep.subr.mxu0 %v1108
        %1248 = vmatpush1.msra.mxu0 %v1107
        %1249 = vmatprep.subr.mxu0 %v1110
        %1250 = vmatpush1.msra.mxu0 %v1109
        %1251 = vmatprep.subr.mxu0 %v1112
        %1252 = vmatpush1.msra.mxu0 %v1111
        %1253 = vmatprep.subr.mxu0 %v1114
        %1254 = vmatpush1.msra.mxu0 %v1113
        %1255 = vmatprep.subr.mxu0 %v1116
        %1256 = vmatpush1.msra.mxu0 %v1115
        %1257 = vmatprep.subr.mxu0 %v1118
        %1258 = vmatpush1.msra.mxu0 %v1117
        %1259 = vmatprep.subr.mxu0 %v1120
        %1260 = vmatpush1.msra.mxu0 %v1119
        %1261 = vmatprep.subr.mxu0 %v1122
        %1262 = vmatpush1.msra.mxu0 %v1121
        %1263 = vmatprep.subr.mxu0 %v1124
        %1264 = vmatpush1.msra.mxu0 %v1123
        %1265 = vmatprep.subr.mxu0 %v1126
        %1266 = vmatpush1.msra.mxu0 %v1125
        %1267 = vmatprep.subr.mxu0 %v1128
        %1268 = vmatpush1.msra.mxu0 %v1127
        %1269 = vmatprep.subr.mxu0 %v1130
        %1270 = vmatpush1.msra.mxu0 %v1129
        %1271 = vmatprep.subr.mxu0 %v1132
        %1272 = vmatpush1.msra.mxu0 %v1131
        %1273 = vmatprep.subr.mxu0 %v1134
        %1274 = vmatpush1.msra.mxu0 %v1133
        %1275 = vmatprep.subr.mxu0 %v1136
        %1276 = vmatpush1.msra.mxu0 %v1135
        %1277 = vmatprep.subr.mxu0 %v1138
        %1278 = vmatpush1.msra.mxu0 %v1137
        %1279 = vmatprep.subr.mxu0 %v1140
        %1280 = vmatpush1.msra.mxu0 %v1139
        %1281 = vmatprep.subr.mxu0 %v1142
        %1282 = vmatpush1.msra.mxu0 %v1141
        %1283 = vmatprep.subr.mxu0 %v1144
        %1284 = vmatpush1.msra.mxu0 %v1143
        %1285 = vmatprep.subr.mxu0 %v1146
        %1286 = vmatpush1.msra.mxu0 %v1145
        %1287 = vmatprep.subr.mxu0 %v1148
        %1288 = vmatpush1.msra.mxu0 %v1147
        %1289 = vmatprep.subr.mxu0 %v1150
        %1290 = vmatpush1.msra.mxu0 %v1149
        %1291 = vmatprep.subr.mxu0 %v1152
        %1292 = vmatpush1.msra.mxu0 %v1151
        %1293 = vmatprep.subr.mxu0 %v1154
        %1294 = vmatpush1.msra.mxu0 %v1153
        %1295 = vmatprep.subr.mxu0 %v1156
        %1296 = vmatpush1.msra.mxu0 %v1155
        %1297 = vmatprep.subr.mxu0 %v1158
        %1298 = vmatpush1.msra.mxu0 %v1157
        %1299 = vmatprep.mubr.f32.mxu0 %v1092
        %1300 = vmatmul.mubr.f32.gmra.mrb[0].mxu0 %v1091
        %v1301 = vpop.f32.mrb[0].mxu0
        %v1302 = vadd.f32 %v1228, %v1301
        %v1303 = vpop.f32.mrb[0].mxu0
        %v1304 = vadd.f32 %v1232, %v1303
        %1305 = vdwg.mxu0
        %1306 = vmatprep.subr.mxu0 %v1160
        %1307 = vmatpush1.msra.mxu0 %v1159
        %1308 = vmatprep.subr.mxu0 %v1162
        %1309 = vmatpush1.msra.mxu0 %v1161
        %1310 = vmatprep.subr.mxu0 %v1164
        %1311 = vmatpush1.msra.mxu0 %v1163
        %1312 = vmatprep.subr.mxu0 %v1166
        %1313 = vmatpush1.msra.mxu0 %v1165
        %1314 = vmatprep.subr.mxu0 %v1168
        %1315 = vmatpush1.msra.mxu0 %v1167
        %1316 = vmatprep.subr.mxu0 %v1170
        %1317 = vmatpush1.msra.mxu0 %v1169
        %1318 = vmatprep.subr.mxu0 %v1172
        %1319 = vmatpush1.msra.mxu0 %v1171
        %1320 = vmatprep.subr.mxu0 %v1174
        %1321 = vmatpush1.msra.mxu0 %v1173
        %1322 = vmatprep.subr.mxu0 %v1176
        %1323 = vmatpush1.msra.mxu0 %v1175
        %1324 = vmatprep.subr.mxu0 %v1178
        %1325 = vmatpush1.msra.mxu0 %v1177
        %1326 = vmatprep.subr.mxu0 %v1180
        %1327 = vmatpush1.msra.mxu0 %v1179
        %1328 = vmatprep.subr.mxu0 %v1182
        %1329 = vmatpush1.msra.mxu0 %v1181
        %1330 = vmatprep.subr.mxu0 %v1184
        %1331 = vmatpush1.msra.mxu0 %v1183
        %1332 = vmatprep.subr.mxu0 %v1186
        %1333 = vmatpush1.msra.mxu0 %v1185
        %1334 = vmatprep.subr.mxu0 %v1188
        %1335 = vmatpush1.msra.mxu0 %v1187
        %1336 = vmatprep.subr.mxu0 %v1190
        %1337 = vmatpush1.msra.mxu0 %v1189
        %1338 = vmatprep.subr.mxu0 %v1192
        %1339 = vmatpush1.msra.mxu0 %v1191
        %1340 = vmatprep.subr.mxu0 %v1194
        %1341 = vmatpush1.msra.mxu0 %v1193
        %1342 = vmatprep.subr.mxu0 %v1196
        %1343 = vmatpush1.msra.mxu0 %v1195
        %1344 = vmatprep.subr.mxu0 %v1198
        %1345 = vmatpush1.msra.mxu0 %v1197
        %1346 = vmatprep.subr.mxu0 %v1200
        %1347 = vmatpush1.msra.mxu0 %v1199
        %1348 = vmatprep.subr.mxu0 %v1202
        %1349 = vmatpush1.msra.mxu0 %v1201
        %1350 = vmatprep.subr.mxu0 %v1204
        %1351 = vmatpush1.msra.mxu0 %v1203
        %1352 = vmatprep.subr.mxu0 %v1206
        %1353 = vmatpush1.msra.mxu0 %v1205
        %1354 = vmatprep.subr.mxu0 %v1208
        %1355 = vmatpush1.msra.mxu0 %v1207
        %1356 = vmatprep.subr.mxu0 %v1210
        %1357 = vmatpush1.msra.mxu0 %v1209
        %1358 = vmatprep.subr.mxu0 %v1212
        %1359 = vmatpush1.msra.mxu0 %v1211
        %1360 = vmatprep.subr.mxu0 %v1214
        %1361 = vmatpush1.msra.mxu0 %v1213
        %1362 = vmatprep.subr.mxu0 %v1216
        %1363 = vmatpush1.msra.mxu0 %v1215
        %1364 = vmatprep.subr.mxu0 %v1218
        %1365 = vmatpush1.msra.mxu0 %v1217
        %1366 = vmatprep.subr.mxu0 %v1220
        %1367 = vmatpush1.msra.mxu0 %v1219
        %1368 = vmatprep.subr.mxu0 %v1222
        %1369 = vmatpush1.msra.mxu0 %v1221
        %1370 = vmatprep.mubr.f32.mxu0 %v1094
        %1371 = vmatmul.mubr.f32.gmra.mrb[0].mxu0 %v1093
        %v1372 = vpop.f32.mrb[0].mxu0
        %v1373 = vadd.f32 %v1302, %v1372
        %v1374 = vpop.f32.mrb[0].mxu0
        %v1375 = vadd.f32 %v1304, %v1374
        %1376 = vdwg.mxu0
        %v1377 = vmax.f32 %v1373, 0.0
        %v1378 = vmax.f32 %v1375, 0.0
        %v1379 = vld [vmem:[%s13] sm:$0xff]
        %v1380 = vld [vmem:[%s13 + $0x8] sm:$0xff]
        %v1381 = vld [vmem:[%s13 + $0x10] sm:$0xff]
        %v1382 = vld [vmem:[%s13 + $0x18] sm:$0xff]
        %v1383 = vld [vmem:[%s13 + $0x20] sm:$0xff]
        %v1384 = vld [vmem:[%s13 + $0x28] sm:$0xff]
        %v1385 = vld [vmem:[%s13 + $0x30] sm:$0xff]
        %v1386 = vld [vmem:[%s13 + $0x38] sm:$0xff]
        %v1387 = vld [vmem:[%s13 + $0x40] sm:$0xff]
        %v1388 = vld [vmem:[%s13 + $0x48] sm:$0xff]
        %v1389 = vld [vmem:[%s13 + $0x50] sm:$0xff]
        %v1390 = vld [vmem:[%s13 + $0x58] sm:$0xff]
        %v1391 = vld [vmem:[%s13 + $0x60] sm:$0xff]
        %v1392 = vld [vmem:[%s13 + $0x68] sm:$0xff]
        %v1393 = vld [vmem:[%s13 + $0x70] sm:$0xff]
        %v1394 = vld [vmem:[%s13 + $0x78] sm:$0xff]
        %v1395 = vld [vmem:[%s13 + $0x80] sm:$0xff]
        %v1396 = vld [vmem:[%s13 + $0x88] sm:$0xff]
        %v1397 = vld [vmem:[%s13 + $0x90] sm:$0xff]
        %v1398 = vld [vmem:[%s13 + $0x98] sm:$0xff]
        %v1399 = vld [vmem:[%s13 + $0xa0] sm:$0xff]
        %v1400 = vld [vmem:[%s13 + $0xa8] sm:$0xff]
        %v1401 = vld [vmem:[%s13 + $0xb0] sm:$0xff]
        %v1402 = vld [vmem:[%s13 + $0xb8] sm:$0xff]
        %v1403 = vld [vmem:[%s13 + $0xc0] sm:$0xff]
        %v1404 = vld [vmem:[%s13 + $0xc8] sm:$0xff]
        %v1405 = vld [vmem:[%s13 + $0xd0] sm:$0xff]
        %v1406 = vld [vmem:[%s13 + $0xd8] sm:$0xff]
        %v1407 = vld [vmem:[%s13 + $0xe0] sm:$0xff]
        %v1408 = vld [vmem:[%s13 + $0xe8] sm:$0xff]
        %v1409 = vld [vmem:[%s13 + $0xf0] sm:$0xff]
        %v1410 = vld [vmem:[%s13 + $0xf8] sm:$0xff]
        %v1411 = vld [vmem:[%s14] sm:$0x1]
        %v1413 = vlaneseq
        %v1414 = vshrl.u32 %v1413, 7
        %v1415 = vsub.s32 0, %v1414
        %v1416 = vrot.slane %v1411, %v1415
        %1418 = vmatprep.subr.mxu0 0.0
        %1419 = vmatpush1.msra.mxu0 %v1379
        %1420 = vmatprep.subr.mxu0 0.0
        %1421 = vmatpush1.msra.mxu0 %v1380
        %1422 = vmatprep.subr.mxu0 0.0
        %1423 = vmatpush1.msra.mxu0 %v1381
        %1424 = vmatprep.subr.mxu0 0.0
        %1425 = vmatpush1.msra.mxu0 %v1382
        %1426 = vmatprep.subr.mxu0 0.0
        %1427 = vmatpush1.msra.mxu0 %v1383
        %1428 = vmatprep.subr.mxu0 0.0
        %1429 = vmatpush1.msra.mxu0 %v1384
        %1430 = vmatprep.subr.mxu0 0.0
        %1431 = vmatpush1.msra.mxu0 %v1385
        %1432 = vmatprep.subr.mxu0 0.0
        %1433 = vmatpush1.msra.mxu0 %v1386
        %1434 = vmatprep.subr.mxu0 0.0
        %1435 = vmatpush1.msra.mxu0 %v1387
        %1436 = vmatprep.subr.mxu0 0.0
        %1437 = vmatpush1.msra.mxu0 %v1388
        %1438 = vmatprep.subr.mxu0 0.0
        %1439 = vmatpush1.msra.mxu0 %v1389
        %1440 = vmatprep.subr.mxu0 0.0
        %1441 = vmatpush1.msra.mxu0 %v1390
        %1442 = vmatprep.subr.mxu0 0.0
        %1443 = vmatpush1.msra.mxu0 %v1391
        %1444 = vmatprep.subr.mxu0 0.0
        %1445 = vmatpush1.msra.mxu0 %v1392
        %1446 = vmatprep.subr.mxu0 0.0
        %1447 = vmatpush1.msra.mxu0 %v1393
        %1448 = vmatprep.subr.mxu0 0.0
        %1449 = vmatpush1.msra.mxu0 %v1394
        %1450 = vmatprep.subr.mxu0 0.0
        %1451 = vmatpush1.msra.mxu0 %v1395
        %1452 = vmatprep.subr.mxu0 0.0
        %1453 = vmatpush1.msra.mxu0 %v1396
        %1454 = vmatprep.subr.mxu0 0.0
        %1455 = vmatpush1.msra.mxu0 %v1397
        %1456 = vmatprep.subr.mxu0 0.0
        %1457 = vmatpush1.msra.mxu0 %v1398
        %1458 = vmatprep.subr.mxu0 0.0
        %1459 = vmatpush1.msra.mxu0 %v1399
        %1460 = vmatprep.subr.mxu0 0.0
        %1461 = vmatpush1.msra.mxu0 %v1400
        %1462 = vmatprep.subr.mxu0 0.0
        %1463 = vmatpush1.msra.mxu0 %v1401
        %1464 = vmatprep.subr.mxu0 0.0
        %1465 = vmatpush1.msra.mxu0 %v1402
        %1466 = vmatprep.subr.mxu0 0.0
        %1467 = vmatpush1.msra.mxu0 %v1403
        %1468 = vmatprep.subr.mxu0 0.0
        %1469 = vmatpush1.msra.mxu0 %v1404
        %1470 = vmatprep.subr.mxu0 0.0
        %1471 = vmatpush1.msra.mxu0 %v1405
        %1472 = vmatprep.subr.mxu0 0.0
        %1473 = vmatpush1.msra.mxu0 %v1406
        %1474 = vmatprep.subr.mxu0 0.0
        %1475 = vmatpush1.msra.mxu0 %v1407
        %1476 = vmatprep.subr.mxu0 0.0
        %1477 = vmatpush1.msra.mxu0 %v1408
        %1478 = vmatprep.subr.mxu0 0.0
        %1479 = vmatpush1.msra.mxu0 %v1409
        %1480 = vmatprep.subr.mxu0 0.0
        %1481 = vmatpush1.msra.mxu0 %v1410
        %1482 = vmatprep.mubr.f32.mxu0 %v1378
        %1483 = vmatmul.mubr.f32.gmra.mrb[0].mxu0 %v1377
        %v1484 = vpop.f32.mrb[0].mxu0
        %v1485 = vadd.f32 %v1416, %v1484
        %v1486 = vpop.f32.mrb[0].mxu0
        %1487 = vdwg.mxu0
        %vm1488 = vcmask 80896
        %1489 = vst.msk [vmem:[%s553] sm:$0xff] %vm1488, %v1485
        %p1490 = scmp.lt.s32.totalorder %s28, 3
        %s1491 = scalar_select %p1490, %s28, 3
        %s1492 = smul.addr %s1491, 8
        %s1493 = scalar_lea.vmem %s15, %s1492
        // Predicated region
        $region89: #{tpu_custom_call.1} parent=79 // pred_check
          %p1494 = pneg %p376
        $region90: #{tpu_custom_call.1} parent=79 // pred_check_branch
          %1496 = sbr.rel (%p1494) target = $region92
        $region91: #{tpu_custom_call.1} parent=79 // pred_region
          _
        $region92: #{tpu_custom_call.1} parent=79 // pred_fallthru
          _
      $region80: #{tpu_custom_call.1} parent=5 // pred_fallthru
        _
      %p1497 = scmp.le.s32.totalorder 2, %s23
      // Predicated region
      $region93: #{tpu_custom_call.1} parent=5 // pred_check
        %p1498 = pneg %p1497
      $region94: #{tpu_custom_call.1} parent=5 // pred_check_branch
        %1500 = sbr.rel (%p1498) target = $region96
      $region95: #{tpu_custom_call.1} parent=5 // pred_region
        %s1501 = ssub.s32 %s23, 2
        // Predicated region
        $region97: #{tpu_custom_call.1} parent=95 // pred_check
          %p1502 = pneg %p382
        $region98: #{tpu_custom_call.1} parent=95 // pred_check_branch
          %1504 = sbr.rel (%p1502) target = $region100
        $region99: #{tpu_custom_call.1} parent=95 // pred_region
          %p1505 = scmp.lt.s32.totalorder %s29, 3
          %s1506 = scalar_select %p1505, %s29, 3
          %s1507 = smul.addr %s1506, 8
          %s1508 = scalar_lea.vmem %s15, %s1507
        $region100: #{tpu_custom_call.1} parent=95 // pred_fallthru
          _
      $region96: #{tpu_custom_call.1} parent=5 // pred_fallthru
        _
    $region6: #{tpu_custom_call.1} parent=1 // loop_footer
      %s27 = sadd.s32 1, %s23
    $region7: #{tpu_custom_call.1} parent=1 // loop_footer_branch
      %22 = sbr.rel target = $region3
    $region8: #{tpu_custom_call.1} parent=1 // loop_exit
      _
    %1509 = vsyncpa [#allocation4], 1
    %s1510 = scalar_lea.sflag [#allocation4], 1
    %1511 = vsyncpa %s1510, 1
    %1512 = vsyncpa [#allocation6], 1

</llo_original>
